<compile_context>
chip_gen: v5e
topology: v5e:2x2
jax: 0.10.0
libtpu: 0.0.40
codegen_flags: <defaults>
</compile_context>

<pallas_src>
import math
import functools

import jax
import jax.numpy as jnp
from jax.experimental import pallas as pl
from jax.experimental.pallas import tpu as pltpu


# ---------------------------------------------------------------------------
# Pallas kernel
# ---------------------------------------------------------------------------
def _layernorm(x, gamma, beta, eps=1e-5):
    mean = jnp.mean(x, axis=-1, keepdims=True)
    var = jnp.mean((x - mean) ** 2, axis=-1, keepdims=True)
    return (x - mean) * jax.lax.rsqrt(var + eps) * gamma + beta


def _gelu_exact(x):
    # nn.GELU() default: exact erf-based GELU (kept exact for parity with PyTorch)
    return 0.5 * x * (1.0 + jax.lax.erf(x * (1.0 / math.sqrt(2.0))))


def encoder_layer_kernel(
    # inputs
    src_ref,
    wqf_ref, bqf_ref,      # fused (q-proj ∘ feature-map): (E, H*F), (1, H*F)
    wkf_ref, bkf_ref,      # fused (k-proj ∘ feature-map): (E, H*F), (1, H*F)
    wv_ref, bv_ref,        # value proj, pre-transposed:   (E, E),   (1, E)
    mask_ref,              # block-diagonal head mask:     (H*F, E)
    wo_ref, bo_ref,        # out proj, pre-transposed, 1/F folded in: (E, E), (1, E)
    w1_ref, b1_ref,        # FFN1 pre-transposed: (E, Hid), (1, Hid)
    w2_ref, b2_ref,        # FFN2 pre-transposed: (Hid, E), (1, E)
    g1_ref, be1_ref, g2_ref, be2_ref,   # LayerNorm params, (1, E)
    # output
    out_ref,
    *,
    batch, seq_len,
):
    B, L = batch, seq_len
    x3 = src_ref[...]                      # (B, L, E)
    E = x3.shape[-1]
    x = x3.reshape(B * L, E)               # leading-dim merge only (layout-free)

    # --- fused QK projection + cos feature map for ALL heads (one matmul each) ---
    qf = jnp.cos(jnp.dot(x, wqf_ref[...], preferred_element_type=jnp.float32)
                 + bqf_ref[...])           # (B*L, H*F)
    kf = jnp.cos(jnp.dot(x, wkf_ref[...], preferred_element_type=jnp.float32)
                 + bkf_ref[...])           # (B*L, H*F)
    v = jnp.dot(x, wv_ref[...], preferred_element_type=jnp.float32) + bv_ref[...]  # (B*L, E)

    # --- linear attention: per-batch KV over sequence, heads kept separate by mask ---
    mask = mask_ref[...]                   # (H*F, E)
    qkv_parts = []
    for b in range(B):                     # B is tiny & static; sublane slices are free
        lo = b * L
        kf_b = kf[lo:lo + L]               # (L, H*F)
        qf_b = qf[lo:lo + L]               # (L, H*F)
        v_b = v[lo:lo + L]                 # (L, E)
        # KV_b = kf_b^T @ v_b  (contract over L; compiler handles operand orientation)
        kv_b = jax.lax.dot_general(
            kf_b, v_b,
            dimension_numbers=(((0,), (0,)), ((), ())),
            preferred_element_type=jnp.float32)          # (H*F, E)
        kv_b = kv_b * mask                 # zero cross-head blocks
        qkv_parts.append(jnp.dot(qf_b, kv_b,
                                 preferred_element_type=jnp.float32))  # (L, E)
    qkv = jnp.concatenate(qkv_parts, axis=0)   # (B*L, E) — sublane concat, cheap

    # --- output projection (1/num_features folded into wo on host) ---
    attn = jnp.dot(qkv, wo_ref[...], preferred_element_type=jnp.float32) + bo_ref[...]

    # --- residual + LayerNorm 1 ---
    s = x + attn
    s = _layernorm(s, g1_ref[...], be1_ref[...])

    # --- feed-forward (exact GELU) ---
    h1 = jnp.dot(s, w1_ref[...], preferred_element_type=jnp.float32) + b1_ref[...]
    h1 = _gelu_exact(h1)
    s2 = jnp.dot(h1, w2_ref[...], preferred_element_type=jnp.float32) + b2_ref[...]

    # --- residual + LayerNorm 2 ---
    s = _layernorm(s + s2, g2_ref[...], be2_ref[...])

    out_ref[...] = s.reshape(B, L, E).astype(out_ref.dtype)


# ---------------------------------------------------------------------------
# Wrapper: host-side weight fusion + pallas_call
# ---------------------------------------------------------------------------
def performer_exp_encoder_layer(src, params, *, num_heads, num_features):
    B, L, E = src.shape
    H, F = num_heads, num_features
    D = E // H
    f32 = jnp.float32

    fw = params["fw"].astype(f32)          # (F, D), shared across heads
    fb = params["fb"].astype(f32)          # (1, F)

    # Block-diagonal feature weight (E, H*F): block h maps head-h channels -> head-h features.
    wfeat = jnp.zeros((E, H * F), f32)
    for h in range(H):
        wfeat = wfeat.at[h * D:(h + 1) * D, h * F:(h + 1) * F].set(fw.T)
    fb_tile = jnp.tile(fb, (1, H))         # (1, H*F)

    # Fuse q/k projections with the feature-map projection (both linear before cos).
    wq_t = params["wq"].astype(f32).T      # (E, E)
    wk_t = params["wk"].astype(f32).T
    wqf = wq_t @ wfeat                     # (E, H*F)
    bqf = params["bq"].astype(f32) @ wfeat + fb_tile
    wkf = wk_t @ wfeat
    bkf = params["bk"].astype(f32) @ wfeat + fb_tile

    wv_t = params["wv"].astype(f32).T      # (E, E)
    bv = params["bv"].astype(f32)

    # Fold (1/sqrt(F)) * (1/sqrt(F)) = 1/F (applied linearly to QKV) into the out-proj.
    wo_t = params["wo"].astype(f32).T / float(num_features)
    bo = params["bo"].astype(f32)

    # Block-diagonal head mask so one (H*F, E) KV matmul keeps heads independent.
    head_mask = jnp.zeros((H * F, E), f32)
    for h in range(H):
        head_mask = head_mask.at[h * F:(h + 1) * F, h * D:(h + 1) * D].set(1.0)

    w1_t = params["w1"].astype(f32).T      # (E, Hid)
    b1 = params["b1"].astype(f32)
    w2_t = params["w2"].astype(f32).T      # (Hid, E)
    b2 = params["b2"].astype(f32)

    g1, be1 = params["g1"].astype(f32), params["be1"].astype(f32)
    g2, be2 = params["g2"].astype(f32), params["be2"].astype(f32)

    weight_args = [wqf, bqf, wkf, bkf, wv_t, bv, head_mask, wo_t, bo,
                   w1_t, b1, w2_t, b2, g1, be1, g2, be2]

    def full_spec(a):
        n = a.ndim
        return pl.BlockSpec(a.shape, lambda i, _n=n: (0,) * _n)

    kernel = functools.partial(encoder_layer_kernel, batch=B, seq_len=L)

    # Whole problem (< 1 MiB) fits in VMEM -> single grid step, no per-step overhead.
    return pl.pallas_call(
        kernel,
        out_shape=jax.ShapeDtypeStruct((B, L, E), src.dtype),
        grid_spec=pltpu.PrefetchScalarGridSpec(
            num_scalar_prefetch=0,
            grid=(1,),
            in_specs=[pl.BlockSpec((B, L, E), lambda i: (0, 0, 0))]
            + [full_spec(a) for a in weight_args],
            out_specs=pl.BlockSpec((B, L, E), lambda i: (0, 0, 0)),
        ),
        compiler_params=pltpu.CompilerParams(
            dimension_semantics=("arbitrary",),
        ),
    )(src, *weight_args)


# ---------------------------------------------------------------------------
# Pure-JAX reference (mirrors the PyTorch math, dropout = identity)
# ---------------------------------------------------------------------------
def reference_forward(src, params, *, num_heads, num_features):
    B, L, E = src.shape
    D = E // num_heads

    def linear(x, w, b):
        return x @ w.T + b

    q = linear(src, params["wq"], params["bq"]).reshape(B, L, num_heads, D)
    k = linear(src, params["wk"], params["bk"]).reshape(B, L, num_heads, D)
    v = linear(src, params["wv"], params["bv"]).reshape(B, L, num_heads, D)

    fw = params["fw"]                    # (F, D)
    fb = params["fb"].reshape(-1)        # (F,)

    def fmap(x):  # (B, L, H, D) -> (B, L, H, F)
        return jnp.cos(jnp.einsum("blhd,fd->blhf", x, fw) + fb)

    qf = fmap(q) / math.sqrt(num_features)
    kf = fmap(k) / math.sqrt(num_features)

    kv = jnp.einsum("blhd,blhe->bhde", kf, v)
    qkv = jnp.einsum("blhd,bhde->blhe", qf, kv).reshape(B, L, E)

    attn = linear(qkv, params["wo"], params["bo"])

    def ln(x, g, b, eps=1e-5):
        m = jnp.mean(x, -1, keepdims=True)
        var = jnp.mean((x - m) ** 2, -1, keepdims=True)
        return (x - m) / jnp.sqrt(var + eps) * g + b

    s = ln(src + attn, params["g1"].reshape(-1), params["be1"].reshape(-1))
    h1 = jax.nn.gelu(linear(s, params["w1"], params["b1"]), approximate=False)
    s2 = linear(h1, params["w2"], params["b2"])
    s = ln(s + s2, params["g2"].reshape(-1), params["be2"].reshape(-1))
    return s


# ---------------------------------------------------------------------------
# Main
# ---------------------------------------------------------------------------
if __name__ == "__main__":
    B, L, E = 2, 8, 32
    num_heads = 4
    head_dim = E // num_heads
    hidden_dim = 64
    num_features = 16

    key = jax.random.PRNGKey(0)
    keys = jax.random.split(key, 16)

    def randn(k, shape, scale=0.1):
        return scale * jax.random.normal(k, shape, dtype=jnp.float32)

    params = {
        # attention projections (out, in) + biases as (1, dim)
        "wq": randn(keys[0], (E, E)), "bq": randn(keys[1], (1, E)),
        "wk": randn(keys[2], (E, E)), "bk": randn(keys[3], (1, E)),
        "wv": randn(keys[4], (E, E)), "bv": randn(keys[5], (1, E)),
        "wo": randn(keys[6], (E, E)), "bo": randn(keys[7], (1, E)),
        # ExpKernelFeatureMap: w ~ randn (F, D), b ~ 2*pi*U[0,1) (1, F)
        "fw": jax.random.normal(keys[8], (num_features, head_dim), dtype=jnp.float32),
        "fb": 2.0 * math.pi * jax.random.uniform(keys[9], (1, num_features), dtype=jnp.float32),
        # FFN
        "w1": randn(keys[10], (hidden_dim, E)), "b1": randn(keys[11], (1, hidden_dim)),
        "w2": randn(keys[12], (E, hidden_dim)), "b2": randn(keys[13], (1, E)),
        # LayerNorms (gamma=1, beta=0)
        "g1": jnp.ones((1, E), jnp.float32), "be1": jnp.zeros((1, E), jnp.float32),
        "g2": jnp.ones((1, E), jnp.float32), "be2": jnp.zeros((1, E), jnp.float32),
    }

    src = jax.random.normal(keys[14], (B, L, E), dtype=jnp.float32)

    out = performer_exp_encoder_layer(
        src, params, num_heads=num_heads, num_features=num_features
    )
    out = jax.block_until_ready(out)

    ref = reference_forward(src, params, num_heads=num_heads, num_features=num_features)
    assert out.shape == (B, L, E)
    assert jnp.allclose(out, ref, atol=1e-3, rtol=1e-3), "mismatch vs reference"

    print("KERNEL_OK")
</pallas_src>

<mosaic_0001>
module attributes {stable_mosaic.version = 11 : i64} {
  func.func @encoder_layer_kernel(%arg0: i32, %arg1: memref<2x8x32xf32, #tpu.memory_space<vmem>>, %arg2: memref<32x64xf32, #tpu.memory_space<vmem>>, %arg3: memref<1x64xf32, #tpu.memory_space<vmem>>, %arg4: memref<32x64xf32, #tpu.memory_space<vmem>>, %arg5: memref<1x64xf32, #tpu.memory_space<vmem>>, %arg6: memref<32x32xf32, #tpu.memory_space<vmem>>, %arg7: memref<1x32xf32, #tpu.memory_space<vmem>>, %arg8: memref<64x32xf32, #tpu.memory_space<vmem>>, %arg9: memref<32x32xf32, #tpu.memory_space<vmem>>, %arg10: memref<1x32xf32, #tpu.memory_space<vmem>>, %arg11: memref<32x64xf32, #tpu.memory_space<vmem>>, %arg12: memref<1x64xf32, #tpu.memory_space<vmem>>, %arg13: memref<64x32xf32, #tpu.memory_space<vmem>>, %arg14: memref<1x32xf32, #tpu.memory_space<vmem>>, %arg15: memref<1x32xf32, #tpu.memory_space<vmem>>, %arg16: memref<1x32xf32, #tpu.memory_space<vmem>>, %arg17: memref<1x32xf32, #tpu.memory_space<vmem>>, %arg18: memref<1x32xf32, #tpu.memory_space<vmem>>, %arg19: memref<2x8x32xf32, #tpu.memory_space<vmem>>) attributes {dimension_semantics = [#tpu.dimension_semantics<arbitrary>], iteration_bounds = array<i64: 1>, scalar_prefetch = 0 : i64, scratch_operands = 0 : i64, tpu.core_type = #tpu.core_type<tc>, window_params = [{pipeline_mode = #tpu.pipeline_mode<synchronous>, transform_indices = @transform_0, window_bounds = array<i64: 2, 8, 32>}, {pipeline_mode = #tpu.pipeline_mode<synchronous>, transform_indices = @transform_1, window_bounds = array<i64: 32, 64>}, {pipeline_mode = #tpu.pipeline_mode<synchronous>, transform_indices = @transform_2, window_bounds = array<i64: 1, 64>}, {pipeline_mode = #tpu.pipeline_mode<synchronous>, transform_indices = @transform_3, window_bounds = array<i64: 32, 64>}, {pipeline_mode = #tpu.pipeline_mode<synchronous>, transform_indices = @transform_4, window_bounds = array<i64: 1, 64>}, {pipeline_mode = #tpu.pipeline_mode<synchronous>, transform_indices = @transform_5, window_bounds = array<i64: 32, 32>}, {pipeline_mode = #tpu.pipeline_mode<synchronous>, transform_indices = @transform_6, window_bounds = array<i64: 1, 32>}, {pipeline_mode = #tpu.pipeline_mode<synchronous>, transform_indices = @transform_7, window_bounds = array<i64: 64, 32>}, {pipeline_mode = #tpu.pipeline_mode<synchronous>, transform_indices = @transform_8, window_bounds = array<i64: 32, 32>}, {pipeline_mode = #tpu.pipeline_mode<synchronous>, transform_indices = @transform_9, window_bounds = array<i64: 1, 32>}, {pipeline_mode = #tpu.pipeline_mode<synchronous>, transform_indices = @transform_10, window_bounds = array<i64: 32, 64>}, {pipeline_mode = #tpu.pipeline_mode<synchronous>, transform_indices = @transform_11, window_bounds = array<i64: 1, 64>}, {pipeline_mode = #tpu.pipeline_mode<synchronous>, transform_indices = @transform_12, window_bounds = array<i64: 64, 32>}, {pipeline_mode = #tpu.pipeline_mode<synchronous>, transform_indices = @transform_13, window_bounds = array<i64: 1, 32>}, {pipeline_mode = #tpu.pipeline_mode<synchronous>, transform_indices = @transform_14, window_bounds = array<i64: 1, 32>}, {pipeline_mode = #tpu.pipeline_mode<synchronous>, transform_indices = @transform_15, window_bounds = array<i64: 1, 32>}, {pipeline_mode = #tpu.pipeline_mode<synchronous>, transform_indices = @transform_16, window_bounds = array<i64: 1, 32>}, {pipeline_mode = #tpu.pipeline_mode<synchronous>, transform_indices = @transform_17, window_bounds = array<i64: 1, 32>}, {pipeline_mode = #tpu.pipeline_mode<synchronous>, transform_indices = @transform_18, window_bounds = array<i64: 2, 8, 32>}]} {
    %c0 = arith.constant 0 : index
    %c0_0 = arith.constant 0 : index
    %c0_1 = arith.constant 0 : index
    %0 = vector.load %arg1[%c0, %c0_0, %c0_1] : memref<2x8x32xf32, #tpu.memory_space<vmem>>, vector<2x8x32xf32>
    %1 = vector.shape_cast %0 : vector<2x8x32xf32> to vector<16x32xf32>
    %c0_2 = arith.constant 0 : index
    %c0_3 = arith.constant 0 : index
    %2 = vector.load %arg2[%c0_2, %c0_3] : memref<32x64xf32, #tpu.memory_space<vmem>>, vector<32x64xf32>
    %cst = arith.constant dense<0.000000e+00> : vector<16x64xf32>
    %3 = tpu.matmul %1, %2, %cst {dimension_numbers = #tpu.dot_dimension_numbers<[1], [0], [0], [1], [0, 0, 1, 1], [], []>} : vector<16x32xf32>, vector<32x64xf32>, vector<16x64xf32> -> vector<16x64xf32>
    %c0_4 = arith.constant 0 : index
    %c0_5 = arith.constant 0 : index
    %4 = vector.load %arg3[%c0_4, %c0_5] : memref<1x64xf32, #tpu.memory_space<vmem>>, vector<1x64xf32>
    %5 = vector.broadcast %4 : vector<1x64xf32> to vector<16x64xf32>
    %6 = arith.addf %3, %5 : vector<16x64xf32>
    %7 = math.cos %6 : vector<16x64xf32>
    %c0_6 = arith.constant 0 : index
    %c0_7 = arith.constant 0 : index
    %8 = vector.load %arg4[%c0_6, %c0_7] : memref<32x64xf32, #tpu.memory_space<vmem>>, vector<32x64xf32>
    %cst_8 = arith.constant dense<0.000000e+00> : vector<16x64xf32>
    %9 = tpu.matmul %1, %8, %cst_8 {dimension_numbers = #tpu.dot_dimension_numbers<[1], [0], [0], [1], [0, 0, 1, 1], [], []>} : vector<16x32xf32>, vector<32x64xf32>, vector<16x64xf32> -> vector<16x64xf32>
    %c0_9 = arith.constant 0 : index
    %c0_10 = arith.constant 0 : index
    %10 = vector.load %arg5[%c0_9, %c0_10] : memref<1x64xf32, #tpu.memory_space<vmem>>, vector<1x64xf32>
    %11 = vector.broadcast %10 : vector<1x64xf32> to vector<16x64xf32>
    %12 = arith.addf %9, %11 : vector<16x64xf32>
    %13 = math.cos %12 : vector<16x64xf32>
    %c0_11 = arith.constant 0 : index
    %c0_12 = arith.constant 0 : index
    %14 = vector.load %arg6[%c0_11, %c0_12] : memref<32x32xf32, #tpu.memory_space<vmem>>, vector<32x32xf32>
    %cst_13 = arith.constant dense<0.000000e+00> : vector<16x32xf32>
    %15 = tpu.matmul %1, %14, %cst_13 {dimension_numbers = #tpu.dot_dimension_numbers<[1], [0], [0], [1], [0, 0, 1, 1], [], []>} : vector<16x32xf32>, vector<32x32xf32>, vector<16x32xf32> -> vector<16x32xf32>
    %c0_14 = arith.constant 0 : index
    %c0_15 = arith.constant 0 : index
    %16 = vector.load %arg7[%c0_14, %c0_15] : memref<1x32xf32, #tpu.memory_space<vmem>>, vector<1x32xf32>
    %17 = vector.broadcast %16 : vector<1x32xf32> to vector<16x32xf32>
    %18 = arith.addf %15, %17 : vector<16x32xf32>
    %c0_16 = arith.constant 0 : index
    %c0_17 = arith.constant 0 : index
    %19 = vector.load %arg8[%c0_16, %c0_17] : memref<64x32xf32, #tpu.memory_space<vmem>>, vector<64x32xf32>
    %20 = vector.extract_strided_slice %13 {offsets = [0, 0], sizes = [8, 64], strides = [1, 1]} : vector<16x64xf32> to vector<8x64xf32>
    %21 = vector.extract_strided_slice %7 {offsets = [0, 0], sizes = [8, 64], strides = [1, 1]} : vector<16x64xf32> to vector<8x64xf32>
    %22 = vector.extract_strided_slice %18 {offsets = [0, 0], sizes = [8, 32], strides = [1, 1]} : vector<16x32xf32> to vector<8x32xf32>
    %cst_18 = arith.constant dense<0.000000e+00> : vector<64x32xf32>
    %23 = tpu.matmul %20, %22, %cst_18 {dimension_numbers = #tpu.dot_dimension_numbers<[0], [0], [1], [1], [0, 1, 1, 1], [], []>} : vector<8x64xf32>, vector<8x32xf32>, vector<64x32xf32> -> vector<64x32xf32>
    %24 = arith.mulf %23, %19 : vector<64x32xf32>
    %cst_19 = arith.constant dense<0.000000e+00> : vector<8x32xf32>
    %25 = tpu.matmul %21, %24, %cst_19 {dimension_numbers = #tpu.dot_dimension_numbers<[1], [0], [0], [1], [0, 0, 1, 1], [], []>} : vector<8x64xf32>, vector<64x32xf32>, vector<8x32xf32> -> vector<8x32xf32>
    %26 = vector.extract_strided_slice %13 {offsets = [8, 0], sizes = [8, 64], strides = [1, 1]} : vector<16x64xf32> to vector<8x64xf32>
    %27 = vector.extract_strided_slice %7 {offsets = [8, 0], sizes = [8, 64], strides = [1, 1]} : vector<16x64xf32> to vector<8x64xf32>
    %28 = vector.extract_strided_slice %18 {offsets = [8, 0], sizes = [8, 32], strides = [1, 1]} : vector<16x32xf32> to vector<8x32xf32>
    %cst_20 = arith.constant dense<0.000000e+00> : vector<64x32xf32>
    %29 = tpu.matmul %26, %28, %cst_20 {dimension_numbers = #tpu.dot_dimension_numbers<[0], [0], [1], [1], [0, 1, 1, 1], [], []>} : vector<8x64xf32>, vector<8x32xf32>, vector<64x32xf32> -> vector<64x32xf32>
    %30 = arith.mulf %29, %19 : vector<64x32xf32>
    %cst_21 = arith.constant dense<0.000000e+00> : vector<8x32xf32>
    %31 = tpu.matmul %27, %30, %cst_21 {dimension_numbers = #tpu.dot_dimension_numbers<[1], [0], [0], [1], [0, 0, 1, 1], [], []>} : vector<8x64xf32>, vector<64x32xf32>, vector<8x32xf32> -> vector<8x32xf32>
    %32 = tpu.concatenate %25, %31 in 0 : vector<8x32xf32>, vector<8x32xf32> -> vector<16x32xf32>
    %c0_22 = arith.constant 0 : index
    %c0_23 = arith.constant 0 : index
    %33 = vector.load %arg9[%c0_22, %c0_23] : memref<32x32xf32, #tpu.memory_space<vmem>>, vector<32x32xf32>
    %cst_24 = arith.constant dense<0.000000e+00> : vector<16x32xf32>
    %34 = tpu.matmul %32, %33, %cst_24 {dimension_numbers = #tpu.dot_dimension_numbers<[1], [0], [0], [1], [0, 0, 1, 1], [], []>} : vector<16x32xf32>, vector<32x32xf32>, vector<16x32xf32> -> vector<16x32xf32>
    %c0_25 = arith.constant 0 : index
    %c0_26 = arith.constant 0 : index
    %35 = vector.load %arg10[%c0_25, %c0_26] : memref<1x32xf32, #tpu.memory_space<vmem>>, vector<1x32xf32>
    %36 = vector.broadcast %35 : vector<1x32xf32> to vector<16x32xf32>
    %37 = arith.addf %34, %36 : vector<16x32xf32>
    %38 = arith.addf %1, %37 : vector<16x32xf32>
    %c0_27 = arith.constant 0 : index
    %c0_28 = arith.constant 0 : index
    %39 = vector.load %arg15[%c0_27, %c0_28] : memref<1x32xf32, #tpu.memory_space<vmem>>, vector<1x32xf32>
    %c0_29 = arith.constant 0 : index
    %c0_30 = arith.constant 0 : index
    %40 = vector.load %arg16[%c0_29, %c0_30] : memref<1x32xf32, #tpu.memory_space<vmem>>, vector<1x32xf32>
    %cst_31 = arith.constant dense<0.000000e+00> : vector<16xf32>
    %41 = vector.multi_reduction <add>, %38, %cst_31 [1] : vector<16x32xf32> to vector<16xf32>
    %42 = vector.shape_cast %41 : vector<16xf32> to vector<16x1xf32>
    %cst_32 = arith.constant 3.200000e+01 : f32
    %43 = vector.broadcast %cst_32 : f32 to vector<16x1xf32>
    %44 = arith.divf %42, %43 : vector<16x1xf32>
    %45 = vector.broadcast %44 : vector<16x1xf32> to vector<16x32xf32>
    %46 = arith.subf %38, %45 : vector<16x32xf32>
    %47 = arith.mulf %46, %46 : vector<16x32xf32>
    %cst_33 = arith.constant dense<0.000000e+00> : vector<16xf32>
    %48 = vector.multi_reduction <add>, %47, %cst_33 [1] : vector<16x32xf32> to vector<16xf32>
    %49 = vector.shape_cast %48 : vector<16xf32> to vector<16x1xf32>
    %cst_34 = arith.constant 3.200000e+01 : f32
    %50 = vector.broadcast %cst_34 : f32 to vector<16x1xf32>
    %51 = arith.divf %49, %50 : vector<16x1xf32>
    %52 = vector.broadcast %44 : vector<16x1xf32> to vector<16x32xf32>
    %53 = arith.subf %38, %52 : vector<16x32xf32>
    %cst_35 = arith.constant 9.99999974E-6 : f32
    %54 = vector.broadcast %cst_35 : f32 to vector<16x1xf32>
    %55 = arith.addf %51, %54 : vector<16x1xf32>
    %56 = math.rsqrt %55 : vector<16x1xf32>
    %57 = vector.broadcast %56 : vector<16x1xf32> to vector<16x32xf32>
    %58 = arith.mulf %53, %57 : vector<16x32xf32>
    %59 = vector.broadcast %39 : vector<1x32xf32> to vector<16x32xf32>
    %60 = arith.mulf %58, %59 : vector<16x32xf32>
    %61 = vector.broadcast %40 : vector<1x32xf32> to vector<16x32xf32>
    %62 = arith.addf %60, %61 : vector<16x32xf32>
    %c0_36 = arith.constant 0 : index
    %c0_37 = arith.constant 0 : index
    %63 = vector.load %arg11[%c0_36, %c0_37] : memref<32x64xf32, #tpu.memory_space<vmem>>, vector<32x64xf32>
    %cst_38 = arith.constant dense<0.000000e+00> : vector<16x64xf32>
    %64 = tpu.matmul %62, %63, %cst_38 {dimension_numbers = #tpu.dot_dimension_numbers<[1], [0], [0], [1], [0, 0, 1, 1], [], []>} : vector<16x32xf32>, vector<32x64xf32>, vector<16x64xf32> -> vector<16x64xf32>
    %c0_39 = arith.constant 0 : index
    %c0_40 = arith.constant 0 : index
    %65 = vector.load %arg12[%c0_39, %c0_40] : memref<1x64xf32, #tpu.memory_space<vmem>>, vector<1x64xf32>
    %66 = vector.broadcast %65 : vector<1x64xf32> to vector<16x64xf32>
    %67 = arith.addf %64, %66 : vector<16x64xf32>
    %cst_41 = arith.constant 5.000000e-01 : f32
    %68 = vector.broadcast %cst_41 : f32 to vector<16x64xf32>
    %69 = arith.mulf %68, %67 : vector<16x64xf32>
    %cst_42 = arith.constant 0.707106769 : f32
    %70 = vector.broadcast %cst_42 : f32 to vector<16x64xf32>
    %71 = arith.mulf %67, %70 : vector<16x64xf32>
    %72 = math.erf %71 : vector<16x64xf32>
    %cst_43 = arith.constant 1.000000e+00 : f32
    %73 = vector.broadcast %cst_43 : f32 to vector<16x64xf32>
    %74 = arith.addf %73, %72 : vector<16x64xf32>
    %75 = arith.mulf %69, %74 : vector<16x64xf32>
    %c0_44 = arith.constant 0 : index
    %c0_45 = arith.constant 0 : index
    %76 = vector.load %arg13[%c0_44, %c0_45] : memref<64x32xf32, #tpu.memory_space<vmem>>, vector<64x32xf32>
    %cst_46 = arith.constant dense<0.000000e+00> : vector<16x32xf32>
    %77 = tpu.matmul %75, %76, %cst_46 {dimension_numbers = #tpu.dot_dimension_numbers<[1], [0], [0], [1], [0, 0, 1, 1], [], []>} : vector<16x64xf32>, vector<64x32xf32>, vector<16x32xf32> -> vector<16x32xf32>
    %c0_47 = arith.constant 0 : index
    %c0_48 = arith.constant 0 : index
    %78 = vector.load %arg14[%c0_47, %c0_48] : memref<1x32xf32, #tpu.memory_space<vmem>>, vector<1x32xf32>
    %79 = vector.broadcast %78 : vector<1x32xf32> to vector<16x32xf32>
    %80 = arith.addf %77, %79 : vector<16x32xf32>
    %81 = arith.addf %62, %80 : vector<16x32xf32>
    %c0_49 = arith.constant 0 : index
    %c0_50 = arith.constant 0 : index
    %82 = vector.load %arg17[%c0_49, %c0_50] : memref<1x32xf32, #tpu.memory_space<vmem>>, vector<1x32xf32>
    %c0_51 = arith.constant 0 : index
    %c0_52 = arith.constant 0 : index
    %83 = vector.load %arg18[%c0_51, %c0_52] : memref<1x32xf32, #tpu.memory_space<vmem>>, vector<1x32xf32>
    %cst_53 = arith.constant dense<0.000000e+00> : vector<16xf32>
    %84 = vector.multi_reduction <add>, %81, %cst_53 [1] : vector<16x32xf32> to vector<16xf32>
    %85 = vector.shape_cast %84 : vector<16xf32> to vector<16x1xf32>
    %cst_54 = arith.constant 3.200000e+01 : f32
    %86 = vector.broadcast %cst_54 : f32 to vector<16x1xf32>
    %87 = arith.divf %85, %86 : vector<16x1xf32>
    %88 = vector.broadcast %87 : vector<16x1xf32> to vector<16x32xf32>
    %89 = arith.subf %81, %88 : vector<16x32xf32>
    %90 = arith.mulf %89, %89 : vector<16x32xf32>
    %cst_55 = arith.constant dense<0.000000e+00> : vector<16xf32>
    %91 = vector.multi_reduction <add>, %90, %cst_55 [1] : vector<16x32xf32> to vector<16xf32>
    %92 = vector.shape_cast %91 : vector<16xf32> to vector<16x1xf32>
    %cst_56 = arith.constant 3.200000e+01 : f32
    %93 = vector.broadcast %cst_56 : f32 to vector<16x1xf32>
    %94 = arith.divf %92, %93 : vector<16x1xf32>
    %95 = vector.broadcast %87 : vector<16x1xf32> to vector<16x32xf32>
    %96 = arith.subf %81, %95 : vector<16x32xf32>
    %cst_57 = arith.constant 9.99999974E-6 : f32
    %97 = vector.broadcast %cst_57 : f32 to vector<16x1xf32>
    %98 = arith.addf %94, %97 : vector<16x1xf32>
    %99 = math.rsqrt %98 : vector<16x1xf32>
    %100 = vector.broadcast %99 : vector<16x1xf32> to vector<16x32xf32>
    %101 = arith.mulf %96, %100 : vector<16x32xf32>
    %102 = vector.broadcast %82 : vector<1x32xf32> to vector<16x32xf32>
    %103 = arith.mulf %101, %102 : vector<16x32xf32>
    %104 = vector.broadcast %83 : vector<1x32xf32> to vector<16x32xf32>
    %105 = arith.addf %103, %104 : vector<16x32xf32>
    %106 = vector.shape_cast %105 : vector<16x32xf32> to vector<2x8x32xf32>
    %c0_58 = arith.constant 0 : index
    %c0_59 = arith.constant 0 : index
    %c0_60 = arith.constant 0 : index
    %107 = vector.load %arg19[%c0_58, %c0_59, %c0_60] : memref<2x8x32xf32, #tpu.memory_space<vmem>>, vector<2x8x32xf32>
    tpu.vector_store %arg19[%c0_58, %c0_59, %c0_60], %106 {strides = array<i32>} : memref<2x8x32xf32, #tpu.memory_space<vmem>>, vector<2x8x32xf32>,
    return
  }
  func.func @transform_0(%arg0: i32) -> (i32, i32, i32) {
    %c0_i32 = arith.constant 0 : i32
    %c0_i32_0 = arith.constant 0 : i32
    %c0_i32_1 = arith.constant 0 : i32
    %c0_i32_2 = arith.constant 0 : i32
    return %c0_i32, %c0_i32_0, %c0_i32_1 : i32, i32, i32
  }
  func.func @transform_1(%arg0: i32) -> (i32, i32) {
    %c0_i32 = arith.constant 0 : i32
    %c0_i32_0 = arith.constant 0 : i32
    %c0_i32_1 = arith.constant 0 : i32
    return %c0_i32, %c0_i32_0 : i32, i32
  }
  func.func @transform_2(%arg0: i32) -> (i32, i32) {
    %c0_i32 = arith.constant 0 : i32
    %c0_i32_0 = arith.constant 0 : i32
    %c0_i32_1 = arith.constant 0 : i32
    return %c0_i32, %c0_i32_0 : i32, i32
  }
  func.func @transform_3(%arg0: i32) -> (i32, i32) {
    %c0_i32 = arith.constant 0 : i32
    %c0_i32_0 = arith.constant 0 : i32
    %c0_i32_1 = arith.constant 0 : i32
    return %c0_i32, %c0_i32_0 : i32, i32
  }
  func.func @transform_4(%arg0: i32) -> (i32, i32) {
    %c0_i32 = arith.constant 0 : i32
    %c0_i32_0 = arith.constant 0 : i32
    %c0_i32_1 = arith.constant 0 : i32
    return %c0_i32, %c0_i32_0 : i32, i32
  }
  func.func @transform_5(%arg0: i32) -> (i32, i32) {
    %c0_i32 = arith.constant 0 : i32
    %c0_i32_0 = arith.constant 0 : i32
    %c0_i32_1 = arith.constant 0 : i32
    return %c0_i32, %c0_i32_0 : i32, i32
  }
  func.func @transform_6(%arg0: i32) -> (i32, i32) {
    %c0_i32 = arith.constant 0 : i32
    %c0_i32_0 = arith.constant 0 : i32
    %c0_i32_1 = arith.constant 0 : i32
    return %c0_i32, %c0_i32_0 : i32, i32
  }
  func.func @transform_7(%arg0: i32) -> (i32, i32) {
    %c0_i32 = arith.constant 0 : i32
    %c0_i32_0 = arith.constant 0 : i32
    %c0_i32_1 = arith.constant 0 : i32
    return %c0_i32, %c0_i32_0 : i32, i32
  }
  func.func @transform_8(%arg0: i32) -> (i32, i32) {
    %c0_i32 = arith.constant 0 : i32
    %c0_i32_0 = arith.constant 0 : i32
    %c0_i32_1 = arith.constant 0 : i32
    return %c0_i32, %c0_i32_0 : i32, i32
  }
  func.func @transform_9(%arg0: i32) -> (i32, i32) {
    %c0_i32 = arith.constant 0 : i32
    %c0_i32_0 = arith.constant 0 : i32
    %c0_i32_1 = arith.constant 0 : i32
    return %c0_i32, %c0_i32_0 : i32, i32
  }
  func.func @transform_10(%arg0: i32) -> (i32, i32) {
    %c0_i32 = arith.constant 0 : i32
    %c0_i32_0 = arith.constant 0 : i32
    %c0_i32_1 = arith.constant 0 : i32
    return %c0_i32, %c0_i32_0 : i32, i32
  }
  func.func @transform_11(%arg0: i32) -> (i32, i32) {
    %c0_i32 = arith.constant 0 : i32
    %c0_i32_0 = arith.constant 0 : i32
    %c0_i32_1 = arith.constant 0 : i32
    return %c0_i32, %c0_i32_0 : i32, i32
  }
  func.func @transform_12(%arg0: i32) -> (i32, i32) {
    %c0_i32 = arith.constant 0 : i32
    %c0_i32_0 = arith.constant 0 : i32
    %c0_i32_1 = arith.constant 0 : i32
    return %c0_i32, %c0_i32_0 : i32, i32
  }
  func.func @transform_13(%arg0: i32) -> (i32, i32) {
    %c0_i32 = arith.constant 0 : i32
    %c0_i32_0 = arith.constant 0 : i32
    %c0_i32_1 = arith.constant 0 : i32
    return %c0_i32, %c0_i32_0 : i32, i32
  }
  func.func @transform_14(%arg0: i32) -> (i32, i32) {
    %c0_i32 = arith.constant 0 : i32
    %c0_i32_0 = arith.constant 0 : i32
    %c0_i32_1 = arith.constant 0 : i32
    return %c0_i32, %c0_i32_0 : i32, i32
  }
  func.func @transform_15(%arg0: i32) -> (i32, i32) {
    %c0_i32 = arith.constant 0 : i32
    %c0_i32_0 = arith.constant 0 : i32
    %c0_i32_1 = arith.constant 0 : i32
    return %c0_i32, %c0_i32_0 : i32, i32
  }
  func.func @transform_16(%arg0: i32) -> (i32, i32) {
    %c0_i32 = arith.constant 0 : i32
    %c0_i32_0 = arith.constant 0 : i32
    %c0_i32_1 = arith.constant 0 : i32
    return %c0_i32, %c0_i32_0 : i32, i32
  }
  func.func @transform_17(%arg0: i32) -> (i32, i32) {
    %c0_i32 = arith.constant 0 : i32
    %c0_i32_0 = arith.constant 0 : i32
    %c0_i32_1 = arith.constant 0 : i32
    return %c0_i32, %c0_i32_0 : i32, i32
  }
  func.func @transform_18(%arg0: i32) -> (i32, i32, i32) {
    %c0_i32 = arith.constant 0 : i32
    %c0_i32_0 = arith.constant 0 : i32
    %c0_i32_1 = arith.constant 0 : i32
    %c0_i32_2 = arith.constant 0 : i32
    return %c0_i32, %c0_i32_0, %c0_i32_1 : i32, i32, i32
  }
}

</mosaic_0001>

<llo_original>
// kernel: tpu_custom_call.1
$region0: #{tpu_custom_call.1}
  #allocation0 [shape = 'u32[]', space=smem, size = 0x4, offset = 0x4, fixed_abs, tag = 'smem constant byte address 0x4 - core index']
  #allocation1 [shape = 'u32[72,128]{1,0:T(1,128)}', space=vmem, size = 0x9000, scoped, tag = 'internal scratch']
  %s0 = inlined_call_operand.hbm [shape: f32[2,8,32], index: 0, kind: input, shape index: {}]
  %s1 = inlined_call_operand.vmem [shape: f32[32,64], index: 1, kind: input, shape index: {}]
  %s2 = inlined_call_operand.hbm [shape: f32[1,64], index: 2, kind: input, shape index: {}]
  %s3 = inlined_call_operand.vmem [shape: f32[32,64], index: 3, kind: input, shape index: {}]
  %s4 = inlined_call_operand.vmem [shape: f32[1,64], index: 4, kind: input, shape index: {}]
  %s5 = inlined_call_operand.vmem [shape: f32[32,32], index: 5, kind: input, shape index: {}]
  %s6 = inlined_call_operand.vmem [shape: f32[1,32], index: 6, kind: input, shape index: {}]
  %s7 = inlined_call_operand.vmem [shape: f32[64,32], index: 7, kind: input, shape index: {}]
  %s8 = inlined_call_operand.vmem [shape: f32[32,32], index: 8, kind: input, shape index: {}]
  %s9 = inlined_call_operand.vmem [shape: f32[1,32], index: 9, kind: input, shape index: {}]
  %s10 = inlined_call_operand.vmem [shape: f32[32,64], index: 10, kind: input, shape index: {}]
  %s11 = inlined_call_operand.vmem [shape: f32[1,64], index: 11, kind: input, shape index: {}]
  %s12 = inlined_call_operand.vmem [shape: f32[64,32], index: 12, kind: input, shape index: {}]
  %s13 = inlined_call_operand.vmem [shape: f32[1,32], index: 13, kind: input, shape index: {}]
  %s14 = inlined_call_operand.vmem [shape: f32[1,32], index: 14, kind: input, shape index: {}]
  %s15 = inlined_call_operand.vmem [shape: f32[1,32], index: 15, kind: input, shape index: {}]
  %s16 = inlined_call_operand.vmem [shape: f32[1,32], index: 16, kind: input, shape index: {}]
  %s17 = inlined_call_operand.vmem [shape: f32[1,32], index: 17, kind: input, shape index: {}]
  %s18 = inlined_call_operand.hbm [shape: f32[2,8,32], index: 18, kind: output, shape index: {}]
  %s19 = sld [smem:[#allocation0]]
  $region90: #{tpu_custom_call.1} parent=0
    _
  %s21 = ssub.s32 1, %s19
  %s22 = scalar_select 0, %s21, %s19
  $region1: #{tpu_custom_call.1} parent=0
    #allocation2 [shape = 'u8[8192]{0}', space=vmem, size = 0x2000, scoped, tag = 'input window, operand 0, single buffered']
    #allocation3 [shape = 's32[1]{0}', space=sflag, size = 0x4, scoped, tag = 'scoped memory for tpu_custom_call.1']
    #allocation4 [shape = 's32[1]{0}', space=sflag, size = 0x4, scoped, tag = 'scoped memory for tpu_custom_call.1']
    #allocation5 [shape = 'u8[512]{0}', space=vmem, size = 0x400, scoped, tag = 'input window, operand 2, single buffered']
    #allocation6 [shape = 's32[1]{0}', space=sflag, size = 0x4, scoped, tag = 'scoped memory for tpu_custom_call.1']
    #allocation7 [shape = 'u8[8192]{0}', space=vmem, size = 0x2000, scoped, tag = 'output window, operand 0, single buffered']
    %23 = vsyncpa [#allocation3], 0
    %24 = vsyncpa [#allocation6], 0
    %25 = vsyncpa [#allocation4], 0
    // Predicated region
    $region2: #{tpu_custom_call.1} parent=1 // pred_check
      _
    $region3: #{tpu_custom_call.1} parent=1 // pred_check_branch
      %27 = sbr.rel (0) target = $region5
    $region4: #{tpu_custom_call.1} parent=1 // pred_region
      %29 = vsyncadd [#allocation3], 0
      %s30 = sshll.u32 %s0, 4
      %s31 = int_to_ptr.hbm [resolvable:$true] %s30
      %s32 = sshll.u32 [#allocation2], 4
      %s33 = int_to_ptr.vmem [resolvable:$true] %s32
      %38 = dma.hbm_to_vmem [thread:$0]  %s31, 256, %s33, [#allocation3], 128, 128, 8
    $region5: #{tpu_custom_call.1} parent=1 // pred_fallthru
      _
    // Predicated region
    $region6: #{tpu_custom_call.1} parent=1 // pred_check
      _
    $region7: #{tpu_custom_call.1} parent=1 // pred_check_branch
      %40 = sbr.rel (0) target = $region9
    $region8: #{tpu_custom_call.1} parent=1 // pred_region
      _
    $region9: #{tpu_custom_call.1} parent=1 // pred_fallthru
      _
    // Predicated region
    $region10: #{tpu_custom_call.1} parent=1 // pred_check
      _
    $region11: #{tpu_custom_call.1} parent=1 // pred_check_branch
      %42 = sbr.rel (0) target = $region13
    $region12: #{tpu_custom_call.1} parent=1 // pred_region
      %44 = vsyncadd [#allocation6], 0
      %s46 = sshll.u32 %s2, 4
      %s47 = int_to_ptr.hbm [resolvable:$true] %s46
      %s48 = sshll.u32 [#allocation5], 4
      %s49 = int_to_ptr.vmem [resolvable:$true] %s48
      %51 = dma.hbm_to_vmem [thread:$0]  %s47, 16, %s49, [#allocation6]
    $region13: #{tpu_custom_call.1} parent=1 // pred_fallthru
      _
    // Predicated region
    $region14: #{tpu_custom_call.1} parent=1 // pred_check
      _
    $region15: #{tpu_custom_call.1} parent=1 // pred_check_branch
      %53 = sbr.rel (0) target = $region17
    $region16: #{tpu_custom_call.1} parent=1 // pred_region
      _
    $region17: #{tpu_custom_call.1} parent=1 // pred_fallthru
      _
    // Predicated region
    $region18: #{tpu_custom_call.1} parent=1 // pred_check
      _
    $region19: #{tpu_custom_call.1} parent=1 // pred_check_branch
      %55 = sbr.rel (0) target = $region21
    $region20: #{tpu_custom_call.1} parent=1 // pred_region
      _
    $region21: #{tpu_custom_call.1} parent=1 // pred_fallthru
      _
    // Predicated region
    $region22: #{tpu_custom_call.1} parent=1 // pred_check
      _
    $region23: #{tpu_custom_call.1} parent=1 // pred_check_branch
      %57 = sbr.rel (0) target = $region25
    $region24: #{tpu_custom_call.1} parent=1 // pred_region
      _
    $region25: #{tpu_custom_call.1} parent=1 // pred_fallthru
      _
    // Predicated region
    $region26: #{tpu_custom_call.1} parent=1 // pred_check
      _
    $region27: #{tpu_custom_call.1} parent=1 // pred_check_branch
      %59 = sbr.rel (0) target = $region29
    $region28: #{tpu_custom_call.1} parent=1 // pred_region
      _
    $region29: #{tpu_custom_call.1} parent=1 // pred_fallthru
      _
    // Predicated region
    $region30: #{tpu_custom_call.1} parent=1 // pred_check
      _
    $region31: #{tpu_custom_call.1} parent=1 // pred_check_branch
      %61 = sbr.rel (0) target = $region33
    $region32: #{tpu_custom_call.1} parent=1 // pred_region
      _
    $region33: #{tpu_custom_call.1} parent=1 // pred_fallthru
      _
    // Predicated region
    $region34: #{tpu_custom_call.1} parent=1 // pred_check
      _
    $region35: #{tpu_custom_call.1} parent=1 // pred_check_branch
      %63 = sbr.rel (0) target = $region37
    $region36: #{tpu_custom_call.1} parent=1 // pred_region
      _
    $region37: #{tpu_custom_call.1} parent=1 // pred_fallthru
      _
    // Predicated region
    $region38: #{tpu_custom_call.1} parent=1 // pred_check
      _
    $region39: #{tpu_custom_call.1} parent=1 // pred_check_branch
      %65 = sbr.rel (0) target = $region41
    $region40: #{tpu_custom_call.1} parent=1 // pred_region
      _
    $region41: #{tpu_custom_call.1} parent=1 // pred_fallthru
      _
    // Predicated region
    $region42: #{tpu_custom_call.1} parent=1 // pred_check
      _
    $region43: #{tpu_custom_call.1} parent=1 // pred_check_branch
      %67 = sbr.rel (0) target = $region45
    $region44: #{tpu_custom_call.1} parent=1 // pred_region
      _
    $region45: #{tpu_custom_call.1} parent=1 // pred_fallthru
      _
    // Predicated region
    $region46: #{tpu_custom_call.1} parent=1 // pred_check
      _
    $region47: #{tpu_custom_call.1} parent=1 // pred_check_branch
      %69 = sbr.rel (0) target = $region49
    $region48: #{tpu_custom_call.1} parent=1 // pred_region
      _
    $region49: #{tpu_custom_call.1} parent=1 // pred_fallthru
      _
    // Predicated region
    $region50: #{tpu_custom_call.1} parent=1 // pred_check
      _
    $region51: #{tpu_custom_call.1} parent=1 // pred_check_branch
      %71 = sbr.rel (0) target = $region53
    $region52: #{tpu_custom_call.1} parent=1 // pred_region
      _
    $region53: #{tpu_custom_call.1} parent=1 // pred_fallthru
      _
    // Predicated region
    $region54: #{tpu_custom_call.1} parent=1 // pred_check
      _
    $region55: #{tpu_custom_call.1} parent=1 // pred_check_branch
      %73 = sbr.rel (0) target = $region57
    $region56: #{tpu_custom_call.1} parent=1 // pred_region
      _
    $region57: #{tpu_custom_call.1} parent=1 // pred_fallthru
      _
    // Predicated region
    $region58: #{tpu_custom_call.1} parent=1 // pred_check
      _
    $region59: #{tpu_custom_call.1} parent=1 // pred_check_branch
      %75 = sbr.rel (0) target = $region61
    $region60: #{tpu_custom_call.1} parent=1 // pred_region
      _
    $region61: #{tpu_custom_call.1} parent=1 // pred_fallthru
      _
    // Predicated region
    $region62: #{tpu_custom_call.1} parent=1 // pred_check
      _
    $region63: #{tpu_custom_call.1} parent=1 // pred_check_branch
      %77 = sbr.rel (0) target = $region65
    $region64: #{tpu_custom_call.1} parent=1 // pred_region
      _
    $region65: #{tpu_custom_call.1} parent=1 // pred_fallthru
      _
    // Predicated region
    $region66: #{tpu_custom_call.1} parent=1 // pred_check
      _
    $region67: #{tpu_custom_call.1} parent=1 // pred_check_branch
      %79 = sbr.rel (0) target = $region69
    $region68: #{tpu_custom_call.1} parent=1 // pred_region
      _
    $region69: #{tpu_custom_call.1} parent=1 // pred_fallthru
      _
    // Predicated region
    $region70: #{tpu_custom_call.1} parent=1 // pred_check
      _
    $region71: #{tpu_custom_call.1} parent=1 // pred_check_branch
      %81 = sbr.rel (0) target = $region73
    $region72: #{tpu_custom_call.1} parent=1 // pred_region
      _
    $region73: #{tpu_custom_call.1} parent=1 // pred_fallthru
      _
    // Predicated region
    $region74: #{tpu_custom_call.1} parent=1 // pred_check
      _
    $region75: #{tpu_custom_call.1} parent=1 // pred_check_branch
      %83 = sbr.rel (0) target = $region77
    $region76: #{tpu_custom_call.1} parent=1 // pred_region
      %85 = dma.done [#allocation3], 256
    $region77: #{tpu_custom_call.1} parent=1 // pred_fallthru
      _
    // Predicated region
    $region78: #{tpu_custom_call.1} parent=1 // pred_check
      _
    $region79: #{tpu_custom_call.1} parent=1 // pred_check_branch
      %87 = sbr.rel (0) target = $region81
    $region80: #{tpu_custom_call.1} parent=1 // pred_region
      %89 = dma.done [#allocation6], 16
    $region81: #{tpu_custom_call.1} parent=1 // pred_fallthru
      _
    %v90 = vld [vmem:[#allocation2] sm:$0xff]
    %v91 = vld [vmem:[#allocation2 + $0x8] sm:$0xff]
    %v92 = vld [vmem:[%s1] sm:$0xff]
    %v93 = vld [vmem:[%s1 + $0x8] sm:$0xff]
    %v94 = vld [vmem:[%s1 + $0x10] sm:$0xff]
    %v95 = vld [vmem:[%s1 + $0x18] sm:$0xff]
    %v96 = vld [vmem:[#allocation5] sm:$0x1]
    %v98 = vperm.slane %v96, 0
    %vm100 = vcmask 261120
    %v102 = vsel %vm100, %v90, 0
    %v105 = vsel %vm100, %v91, 0
    %107 = vmatpush.msra.mxu0 0.0
    %108 = vmatpush.msra.mxu0 0.0
    %109 = vmatpush.msra.mxu0 0.0
    %110 = vmatpush.msra.mxu0 0.0
    %111 = vmatpush.msra.mxu0 0.0
    %112 = vmatpush.msra.mxu0 0.0
    %113 = vmatpush.msra.mxu0 0.0
    %114 = vmatpush.msra.mxu0 0.0
    %115 = vmatpush.msra.mxu0 0.0
    %116 = vmatpush.msra.mxu0 0.0
    %117 = vmatpush.msra.mxu0 0.0
    %118 = vmatpush.msra.mxu0 0.0
    %119 = vmatpush.msra.mxu0 %v95
    %120 = vmatpush.msra.mxu0 %v94
    %121 = vmatpush.msra.mxu0 %v93
    %122 = vmatpush.msra.mxu0 %v92
    %123 = vmatmul.f32.gmra.mxu0 %v102
    %v124 = vpop.f32.mrf.mxu0
    %v125 = vadd.f32 %v98, %v124
    %126 = vmatmul.f32.gmra.mxu0 %v105
    %v127 = vpop.f32.mrf.mxu0
    %v128 = vadd.f32 %v98, %v127
    %129 = vdwg.mxu0
    %v130 = vand.u32 2147483647, %v125
    %vm131 = vcmp.le.f32.partialorder %v130, 0.7853982
    %vm132 = vcmp.lt.s32.totalorder %v125, 0
    %v133 = vand.u32 %v125, 2139095040
    %v134 = vshrl.u32 %v133, 23
    %v135 = vsub.s32 %v134, 127
    %v136 = vand.u32 2147483647, %v125
    %v137 = vand.u32 %v136, 8388607
    %v138 = vor.u32 %v137, 8388608
    %v139 = vsub.s32 0, %v138
    %v140 = vadd.s32 %v135, 1
    %vm141 = vcmp.gt.s32.totalorder %v140, 0
    %v142 = vsel %vm141, %v140, 0
    %v143 = vshrl.u32 %v142, 5
    %v144 = vand.u32 %v142, 31
    %v145 = vsub.s32 32, %v144
    %v146 = vshrl.u32 683565275, %v145
    %v147 = vshll.u32 683565275, %v144
    %v148 = vshrl.u32 2475754826, %v145
    %v149 = vor.u32 %v147, %v148
    %v150 = vshll.u32 2475754826, %v144
    %v151 = vshrl.u32 2131351028, %v145
    %v152 = vor.u32 %v150, %v151
    %v153 = vshll.u32 2131351028, %v144
    %v154 = vshrl.u32 2102212464, %v145
    %v155 = vor.u32 %v153, %v154
    %v156 = vshll.u32 2102212464, %v144
    %v157 = vshrl.u32 920167782, %v145
    %v158 = vor.u32 %v156, %v157
    %v159 = vshll.u32 920167782, %v144
    %v160 = vshrl.u32 1326507024, %v145
    %v161 = vor.u32 %v159, %v160
    %vm162 = vcmp.lt.s32.totalorder %v143, 1
    %vm163 = vcmp.lt.s32.totalorder %v143, 2
    %vm164 = vcmp.lt.s32.totalorder %v143, 3
    %vm165 = vcmp.lt.s32.totalorder %v143, 4
    %v166 = vsel %vm162, %v146, %v149
    %v167 = vsel %vm165, %v155, 2102212464
    %v168 = vsel %vm164, %v152, %v167
    %v169 = vsel %vm163, %v166, %v168
    %v170 = vsel %vm162, %v149, %v152
    %v171 = vsel %vm165, %v158, 920167782
    %v172 = vsel %vm164, %v155, %v171
    %v173 = vsel %vm163, %v170, %v172
    %v174 = vsel %vm162, %v152, %v155
    %v175 = vsel %vm165, %v161, 1326507024
    %v176 = vsel %vm164, %v158, %v175
    %v177 = vsel %vm163, %v174, %v176
    %v178 = vshll.u32 %v138, 8
    %v179 = vand.u32 %v178, 65535
    %v180 = vshrl.u32 %v178, 16
    %v181 = vand.u32 %v177, 65535
    %v182 = vshrl.u32 %v177, 16
    %v183 = vmul.u32 %v179, %v181
    %v184 = vmul.u32 %v179, %v182
    %v185 = vmul.u32 %v180, %v181
    %v186 = vmul.u32 %v180, %v182
    %v187 = vshll.u32 %v184, 16
    %v188 = vshrl.u32 %v184, 16
    %v189 = vshll.u32 %v185, 16
    %v190 = vshrl.u32 %v185, 16
    %vm191 = vc.u32 %v183, %v187
    %v192 = vsel %vm191, 1, 0
    %v193 = vadd.s32 %v183, %v187
    %v194 = vadd.s32 %v186, %v192
    %vm195 = vc.u32 %v193, %v189
    %v196 = vsel %vm195, 1, 0
    %v197 = vadd.s32 %v193, %v189
    %v198 = vadd.s32 %v194, %v196
    %v199 = vadd.s32 %v198, %v188
    %v200 = vadd.s32 %v199, %v190
    %v201 = vand.u32 %v178, 65535
    %v202 = vshrl.u32 %v178, 16
    %v203 = vand.u32 %v173, 65535
    %v204 = vshrl.u32 %v173, 16
    %v205 = vmul.u32 %v201, %v203
    %v206 = vmul.u32 %v201, %v204
    %v207 = vmul.u32 %v202, %v203
    %v208 = vmul.u32 %v202, %v204
    %v209 = vshll.u32 %v206, 16
    %v210 = vshrl.u32 %v206, 16
    %v211 = vshll.u32 %v207, 16
    %v212 = vshrl.u32 %v207, 16
    %vm213 = vc.u32 %v205, %v209
    %v214 = vsel %vm213, 1, 0
    %v215 = vadd.s32 %v205, %v209
    %v216 = vadd.s32 %v208, %v214
    %vm217 = vc.u32 %v215, %v211
    %v218 = vsel %vm217, 1, 0
    %v219 = vadd.s32 %v215, %v211
    %v220 = vadd.s32 %v216, %v218
    %v221 = vadd.s32 %v220, %v210
    %v222 = vadd.s32 %v221, %v212
    %v223 = vmul.u32 %v178, %v169
    %v224 = vadd.s32 %v200, %v219
    %vm225 = vc.u32 %v200, %v219
    %v226 = vadd.s32 %v222, 1
    %v227 = vsel %vm225, %v226, %v222
    %v228 = vadd.s32 %v223, %v227
    %v229 = vadd.s32 %v228, 536870912
    %v230 = vshrl.u32 %v229, 30
    %v231 = vshll.u32 %v230, 30
    %v232 = vsub.s32 %v228, %v231
    %vm233 = vcmp.lt.s32.totalorder %v232, 0
    %v234 = vsub.s32 0, %v232
    %v235 = vsel %vm233, %v234, %v232
    %v236 = vclz %v235
    %v237 = vsub.s32 %v236, 2
    %vm238 = vcmp.gt.s32.totalorder 0, %v237
    %v239 = vsel %vm238, 0, %v237
    %v240 = vsub.s32 32, %v239
    %v241 = vshll.u32 %v232, %v239
    %v242 = vshrl.u32 %v224, %v240
    %v243 = vor.u32 %v241, %v242
    %v244 = vsub.s32 4294967266, %v239
    %v245 = vadd.s32 %v244, 127
    %v246 = vshll.u32 %v245, 23
    %v247 = vor.u32 4788187, %v246
    %v248 = vand.u32 2147483647, %v247
    %v250 = vcvt.s32.f32 %v243
    %v251 = vmul.f32 %v250, %v248
    %v252 = vxor.u32 %v251, 2147483648
    %v253 = vsel %vm132, %v252, %v251
    %v254 = vsub.s32 4, %v230
    %v255 = vsel %vm132, %v254, %v230
    %v256 = vsel %vm131, %v125, %v253
    %v257 = vsel %vm131, 0, %v255
    %v258 = vmul.f32 %v256, %v256
    %v259 = vmul.f32 %v258, -0.001358992
    %v260 = vadd.f32 %v259, 0.041655596
    %v261 = vmul.f32 %v258, %v260
    %v262 = vadd.f32 %v261, -0.4999988
    %v263 = vmul.f32 %v258, %v262
    %v264 = vadd.f32 1.0, %v263
    %v265 = vmul.f32 %v256, %v256
    %v266 = vmul.f32 %v265, -0.00019511016
    %v267 = vadd.f32 %v266, 0.008332121
    %v268 = vmul.f32 %v265, %v267
    %v269 = vadd.f32 %v268, -0.16666654
    %v270 = vmul.f32 %v265, %v269
    %v271 = vadd.f32 %v270, 1.0
    %v272 = vmul.f32 %v271, %v256
    %vm273 = vweird.f32 %v125
    %v274 = vand.u32 %v257, 3
    %vm275 = vcmp.lt.s32.totalorder %v274, 2
    %vm276 = vcmp.eq.s32.totalorder %v274, 0
    %v277 = vxor.u32 %v272, 2147483648
    %v278 = vsel %vm276, %v264, %v277
    %vm279 = vcmp.eq.s32.totalorder %v274, 2
    %v280 = vxor.u32 %v264, 2147483648
    %v281 = vsel %vm279, %v280, %v272
    %v282 = vsel %vm275, %v278, %v281
    %v283 = vsel %vm273, nan, %v282
    %v284 = vand.u32 2147483647, %v128
    %vm285 = vcmp.le.f32.partialorder %v284, 0.7853982
    %vm286 = vcmp.lt.s32.totalorder %v128, 0
    %v287 = vand.u32 %v128, 2139095040
    %v288 = vshrl.u32 %v287, 23
    %v289 = vsub.s32 %v288, 127
    %v290 = vand.u32 2147483647, %v128
    %v291 = vand.u32 %v290, 8388607
    %v292 = vor.u32 %v291, 8388608
    %v293 = vsub.s32 0, %v292
    %v294 = vadd.s32 %v289, 1
    %vm295 = vcmp.gt.s32.totalorder %v294, 0
    %v296 = vsel %vm295, %v294, 0
    %v297 = vshrl.u32 %v296, 5
    %v298 = vand.u32 %v296, 31
    %v299 = vsub.s32 32, %v298
    %v300 = vshrl.u32 683565275, %v299
    %v301 = vshll.u32 683565275, %v298
    %v302 = vshrl.u32 2475754826, %v299
    %v303 = vor.u32 %v301, %v302
    %v304 = vshll.u32 2475754826, %v298
    %v305 = vshrl.u32 2131351028, %v299
    %v306 = vor.u32 %v304, %v305
    %v307 = vshll.u32 2131351028, %v298
    %v308 = vshrl.u32 2102212464, %v299
    %v309 = vor.u32 %v307, %v308
    %v310 = vshll.u32 2102212464, %v298
    %v311 = vshrl.u32 920167782, %v299
    %v312 = vor.u32 %v310, %v311
    %v313 = vshll.u32 920167782, %v298
    %v314 = vshrl.u32 1326507024, %v299
    %v315 = vor.u32 %v313, %v314
    %vm316 = vcmp.lt.s32.totalorder %v297, 1
    %vm317 = vcmp.lt.s32.totalorder %v297, 2
    %vm318 = vcmp.lt.s32.totalorder %v297, 3
    %vm319 = vcmp.lt.s32.totalorder %v297, 4
    %v320 = vsel %vm316, %v300, %v303
    %v321 = vsel %vm319, %v309, 2102212464
    %v322 = vsel %vm318, %v306, %v321
    %v323 = vsel %vm317, %v320, %v322
    %v324 = vsel %vm316, %v303, %v306
    %v325 = vsel %vm319, %v312, 920167782
    %v326 = vsel %vm318, %v309, %v325
    %v327 = vsel %vm317, %v324, %v326
    %v328 = vsel %vm316, %v306, %v309
    %v329 = vsel %vm319, %v315, 1326507024
    %v330 = vsel %vm318, %v312, %v329
    %v331 = vsel %vm317, %v328, %v330
    %v332 = vshll.u32 %v292, 8
    %v333 = vand.u32 %v332, 65535
    %v334 = vshrl.u32 %v332, 16
    %v335 = vand.u32 %v331, 65535
    %v336 = vshrl.u32 %v331, 16
    %v337 = vmul.u32 %v333, %v335
    %v338 = vmul.u32 %v333, %v336
    %v339 = vmul.u32 %v334, %v335
    %v340 = vmul.u32 %v334, %v336
    %v341 = vshll.u32 %v338, 16
    %v342 = vshrl.u32 %v338, 16
    %v343 = vshll.u32 %v339, 16
    %v344 = vshrl.u32 %v339, 16
    %vm345 = vc.u32 %v337, %v341
    %v346 = vsel %vm345, 1, 0
    %v347 = vadd.s32 %v337, %v341
    %v348 = vadd.s32 %v340, %v346
    %vm349 = vc.u32 %v347, %v343
    %v350 = vsel %vm349, 1, 0
    %v351 = vadd.s32 %v347, %v343
    %v352 = vadd.s32 %v348, %v350
    %v353 = vadd.s32 %v352, %v342
    %v354 = vadd.s32 %v353, %v344
    %v355 = vand.u32 %v332, 65535
    %v356 = vshrl.u32 %v332, 16
    %v357 = vand.u32 %v327, 65535
    %v358 = vshrl.u32 %v327, 16
    %v359 = vmul.u32 %v355, %v357
    %v360 = vmul.u32 %v355, %v358
    %v361 = vmul.u32 %v356, %v357
    %v362 = vmul.u32 %v356, %v358
    %v363 = vshll.u32 %v360, 16
    %v364 = vshrl.u32 %v360, 16
    %v365 = vshll.u32 %v361, 16
    %v366 = vshrl.u32 %v361, 16
    %vm367 = vc.u32 %v359, %v363
    %v368 = vsel %vm367, 1, 0
    %v369 = vadd.s32 %v359, %v363
    %v370 = vadd.s32 %v362, %v368
    %vm371 = vc.u32 %v369, %v365
    %v372 = vsel %vm371, 1, 0
    %v373 = vadd.s32 %v369, %v365
    %v374 = vadd.s32 %v370, %v372
    %v375 = vadd.s32 %v374, %v364
    %v376 = vadd.s32 %v375, %v366
    %v377 = vmul.u32 %v332, %v323
    %v378 = vadd.s32 %v354, %v373
    %vm379 = vc.u32 %v354, %v373
    %v380 = vadd.s32 %v376, 1
    %v381 = vsel %vm379, %v380, %v376
    %v382 = vadd.s32 %v377, %v381
    %v383 = vadd.s32 %v382, 536870912
    %v384 = vshrl.u32 %v383, 30
    %v385 = vshll.u32 %v384, 30
    %v386 = vsub.s32 %v382, %v385
    %vm387 = vcmp.lt.s32.totalorder %v386, 0
    %v388 = vsub.s32 0, %v386
    %v389 = vsel %vm387, %v388, %v386
    %v390 = vclz %v389
    %v391 = vsub.s32 %v390, 2
    %vm392 = vcmp.gt.s32.totalorder 0, %v391
    %v393 = vsel %vm392, 0, %v391
    %v394 = vsub.s32 32, %v393
    %v395 = vshll.u32 %v386, %v393
    %v396 = vshrl.u32 %v378, %v394
    %v397 = vor.u32 %v395, %v396
    %v398 = vsub.s32 4294967266, %v393
    %v399 = vadd.s32 %v398, 127
    %v400 = vshll.u32 %v399, 23
    %v401 = vor.u32 4788187, %v400
    %v402 = vand.u32 2147483647, %v401
    %v404 = vcvt.s32.f32 %v397
    %v405 = vmul.f32 %v404, %v402
    %v406 = vxor.u32 %v405, 2147483648
    %v407 = vsel %vm286, %v406, %v405
    %v408 = vsub.s32 4, %v384
    %v409 = vsel %vm286, %v408, %v384
    %v410 = vsel %vm285, %v128, %v407
    %v411 = vsel %vm285, 0, %v409
    %v412 = vmul.f32 %v410, %v410
    %v413 = vmul.f32 %v412, -0.001358992
    %v414 = vadd.f32 %v413, 0.041655596
    %v415 = vmul.f32 %v412, %v414
    %v416 = vadd.f32 %v415, -0.4999988
    %v417 = vmul.f32 %v412, %v416
    %v418 = vadd.f32 1.0, %v417
    %v419 = vmul.f32 %v410, %v410
    %v420 = vmul.f32 %v419, -0.00019511016
    %v421 = vadd.f32 %v420, 0.008332121
    %v422 = vmul.f32 %v419, %v421
    %v423 = vadd.f32 %v422, -0.16666654
    %v424 = vmul.f32 %v419, %v423
    %v425 = vadd.f32 %v424, 1.0
    %v426 = vmul.f32 %v425, %v410
    %vm427 = vweird.f32 %v128
    %v428 = vand.u32 %v411, 3
    %vm429 = vcmp.lt.s32.totalorder %v428, 2
    %vm430 = vcmp.eq.s32.totalorder %v428, 0
    %v431 = vxor.u32 %v426, 2147483648
    %v432 = vsel %vm430, %v418, %v431
    %vm433 = vcmp.eq.s32.totalorder %v428, 2
    %v434 = vxor.u32 %v418, 2147483648
    %v435 = vsel %vm433, %v434, %v426
    %v436 = vsel %vm429, %v432, %v435
    %v437 = vsel %vm427, nan, %v436
    %v438 = vld [vmem:[%s3] sm:$0xff]
    %v439 = vld [vmem:[%s3 + $0x8] sm:$0xff]
    %v440 = vld [vmem:[%s3 + $0x10] sm:$0xff]
    %v441 = vld [vmem:[%s3 + $0x18] sm:$0xff]
    %v442 = vld [vmem:[%s4] sm:$0x1]
    %v444 = vperm.slane %v442, 0
    %446 = vmatpush.msra.mxu0 0.0
    %447 = vmatpush.msra.mxu0 0.0
    %448 = vmatpush.msra.mxu0 0.0
    %449 = vmatpush.msra.mxu0 0.0
    %450 = vmatpush.msra.mxu0 0.0
    %451 = vmatpush.msra.mxu0 0.0
    %452 = vmatpush.msra.mxu0 0.0
    %453 = vmatpush.msra.mxu0 0.0
    %454 = vmatpush.msra.mxu0 0.0
    %455 = vmatpush.msra.mxu0 0.0
    %456 = vmatpush.msra.mxu0 0.0
    %457 = vmatpush.msra.mxu0 0.0
    %458 = vmatpush.msra.mxu0 %v441
    %459 = vmatpush.msra.mxu0 %v440
    %460 = vmatpush.msra.mxu0 %v439
    %461 = vmatpush.msra.mxu0 %v438
    %462 = vmatmul.f32.gmra.mxu0 %v102
    %v463 = vpop.f32.mrf.mxu0
    %v464 = vadd.f32 %v444, %v463
    %465 = vmatmul.f32.gmra.mxu0 %v105
    %v466 = vpop.f32.mrf.mxu0
    %v467 = vadd.f32 %v444, %v466
    %468 = vdwg.mxu0
    %v469 = vand.u32 2147483647, %v464
    %vm470 = vcmp.le.f32.partialorder %v469, 0.7853982
    %vm471 = vcmp.lt.s32.totalorder %v464, 0
    %v472 = vand.u32 %v464, 2139095040
    %v473 = vshrl.u32 %v472, 23
    %v474 = vsub.s32 %v473, 127
    %v475 = vand.u32 2147483647, %v464
    %v476 = vand.u32 %v475, 8388607
    %v477 = vor.u32 %v476, 8388608
    %v478 = vsub.s32 0, %v477
    %v479 = vadd.s32 %v474, 1
    %vm480 = vcmp.gt.s32.totalorder %v479, 0
    %v481 = vsel %vm480, %v479, 0
    %v482 = vshrl.u32 %v481, 5
    %v483 = vand.u32 %v481, 31
    %v484 = vsub.s32 32, %v483
    %v485 = vshrl.u32 683565275, %v484
    %v486 = vshll.u32 683565275, %v483
    %v487 = vshrl.u32 2475754826, %v484
    %v488 = vor.u32 %v486, %v487
    %v489 = vshll.u32 2475754826, %v483
    %v490 = vshrl.u32 2131351028, %v484
    %v491 = vor.u32 %v489, %v490
    %v492 = vshll.u32 2131351028, %v483
    %v493 = vshrl.u32 2102212464, %v484
    %v494 = vor.u32 %v492, %v493
    %v495 = vshll.u32 2102212464, %v483
    %v496 = vshrl.u32 920167782, %v484
    %v497 = vor.u32 %v495, %v496
    %v498 = vshll.u32 920167782, %v483
    %v499 = vshrl.u32 1326507024, %v484
    %v500 = vor.u32 %v498, %v499
    %vm501 = vcmp.lt.s32.totalorder %v482, 1
    %vm502 = vcmp.lt.s32.totalorder %v482, 2
    %vm503 = vcmp.lt.s32.totalorder %v482, 3
    %vm504 = vcmp.lt.s32.totalorder %v482, 4
    %v505 = vsel %vm501, %v485, %v488
    %v506 = vsel %vm504, %v494, 2102212464
    %v507 = vsel %vm503, %v491, %v506
    %v508 = vsel %vm502, %v505, %v507
    %v509 = vsel %vm501, %v488, %v491
    %v510 = vsel %vm504, %v497, 920167782
    %v511 = vsel %vm503, %v494, %v510
    %v512 = vsel %vm502, %v509, %v511
    %v513 = vsel %vm501, %v491, %v494
    %v514 = vsel %vm504, %v500, 1326507024
    %v515 = vsel %vm503, %v497, %v514
    %v516 = vsel %vm502, %v513, %v515
    %v517 = vshll.u32 %v477, 8
    %v518 = vand.u32 %v517, 65535
    %v519 = vshrl.u32 %v517, 16
    %v520 = vand.u32 %v516, 65535
    %v521 = vshrl.u32 %v516, 16
    %v522 = vmul.u32 %v518, %v520
    %v523 = vmul.u32 %v518, %v521
    %v524 = vmul.u32 %v519, %v520
    %v525 = vmul.u32 %v519, %v521
    %v526 = vshll.u32 %v523, 16
    %v527 = vshrl.u32 %v523, 16
    %v528 = vshll.u32 %v524, 16
    %v529 = vshrl.u32 %v524, 16
    %vm530 = vc.u32 %v522, %v526
    %v531 = vsel %vm530, 1, 0
    %v532 = vadd.s32 %v522, %v526
    %v533 = vadd.s32 %v525, %v531
    %vm534 = vc.u32 %v532, %v528
    %v535 = vsel %vm534, 1, 0
    %v536 = vadd.s32 %v532, %v528
    %v537 = vadd.s32 %v533, %v535
    %v538 = vadd.s32 %v537, %v527
    %v539 = vadd.s32 %v538, %v529
    %v540 = vand.u32 %v517, 65535
    %v541 = vshrl.u32 %v517, 16
    %v542 = vand.u32 %v512, 65535
    %v543 = vshrl.u32 %v512, 16
    %v544 = vmul.u32 %v540, %v542
    %v545 = vmul.u32 %v540, %v543
    %v546 = vmul.u32 %v541, %v542
    %v547 = vmul.u32 %v541, %v543
    %v548 = vshll.u32 %v545, 16
    %v549 = vshrl.u32 %v545, 16
    %v550 = vshll.u32 %v546, 16
    %v551 = vshrl.u32 %v546, 16
    %vm552 = vc.u32 %v544, %v548
    %v553 = vsel %vm552, 1, 0
    %v554 = vadd.s32 %v544, %v548
    %v555 = vadd.s32 %v547, %v553
    %vm556 = vc.u32 %v554, %v550
    %v557 = vsel %vm556, 1, 0
    %v558 = vadd.s32 %v554, %v550
    %v559 = vadd.s32 %v555, %v557
    %v560 = vadd.s32 %v559, %v549
    %v561 = vadd.s32 %v560, %v551
    %v562 = vmul.u32 %v517, %v508
    %v563 = vadd.s32 %v539, %v558
    %vm564 = vc.u32 %v539, %v558
    %v565 = vadd.s32 %v561, 1
    %v566 = vsel %vm564, %v565, %v561
    %v567 = vadd.s32 %v562, %v566
    %v568 = vadd.s32 %v567, 536870912
    %v569 = vshrl.u32 %v568, 30
    %v570 = vshll.u32 %v569, 30
    %v571 = vsub.s32 %v567, %v570
    %vm572 = vcmp.lt.s32.totalorder %v571, 0
    %v573 = vsub.s32 0, %v571
    %v574 = vsel %vm572, %v573, %v571
    %v575 = vclz %v574
    %v576 = vsub.s32 %v575, 2
    %vm577 = vcmp.gt.s32.totalorder 0, %v576
    %v578 = vsel %vm577, 0, %v576
    %v579 = vsub.s32 32, %v578
    %v580 = vshll.u32 %v571, %v578
    %v581 = vshrl.u32 %v563, %v579
    %v582 = vor.u32 %v580, %v581
    %v583 = vsub.s32 4294967266, %v578
    %v584 = vadd.s32 %v583, 127
    %v585 = vshll.u32 %v584, 23
    %v586 = vor.u32 4788187, %v585
    %v587 = vand.u32 2147483647, %v586
    %v589 = vcvt.s32.f32 %v582
    %v590 = vmul.f32 %v589, %v587
    %v591 = vxor.u32 %v590, 2147483648
    %v592 = vsel %vm471, %v591, %v590
    %v593 = vsub.s32 4, %v569
    %v594 = vsel %vm471, %v593, %v569
    %v595 = vsel %vm470, %v464, %v592
    %v596 = vsel %vm470, 0, %v594
    %v597 = vmul.f32 %v595, %v595
    %v598 = vmul.f32 %v597, -0.001358992
    %v599 = vadd.f32 %v598, 0.041655596
    %v600 = vmul.f32 %v597, %v599
    %v601 = vadd.f32 %v600, -0.4999988
    %v602 = vmul.f32 %v597, %v601
    %v603 = vadd.f32 1.0, %v602
    %v604 = vmul.f32 %v595, %v595
    %v605 = vmul.f32 %v604, -0.00019511016
    %v606 = vadd.f32 %v605, 0.008332121
    %v607 = vmul.f32 %v604, %v606
    %v608 = vadd.f32 %v607, -0.16666654
    %v609 = vmul.f32 %v604, %v608
    %v610 = vadd.f32 %v609, 1.0
    %v611 = vmul.f32 %v610, %v595
    %vm612 = vweird.f32 %v464
    %v613 = vand.u32 %v596, 3
    %vm614 = vcmp.lt.s32.totalorder %v613, 2
    %vm615 = vcmp.eq.s32.totalorder %v613, 0
    %v616 = vxor.u32 %v611, 2147483648
    %v617 = vsel %vm615, %v603, %v616
    %vm618 = vcmp.eq.s32.totalorder %v613, 2
    %v619 = vxor.u32 %v603, 2147483648
    %v620 = vsel %vm618, %v619, %v611
    %v621 = vsel %vm614, %v617, %v620
    %v622 = vsel %vm612, nan, %v621
    %v623 = vand.u32 2147483647, %v467
    %vm624 = vcmp.le.f32.partialorder %v623, 0.7853982
    %vm625 = vcmp.lt.s32.totalorder %v467, 0
    %v626 = vand.u32 %v467, 2139095040
    %v627 = vshrl.u32 %v626, 23
    %v628 = vsub.s32 %v627, 127
    %v629 = vand.u32 2147483647, %v467
    %v630 = vand.u32 %v629, 8388607
    %v631 = vor.u32 %v630, 8388608
    %v632 = vsub.s32 0, %v631
    %v633 = vadd.s32 %v628, 1
    %vm634 = vcmp.gt.s32.totalorder %v633, 0
    %v635 = vsel %vm634, %v633, 0
    %v636 = vshrl.u32 %v635, 5
    %v637 = vand.u32 %v635, 31
    %v638 = vsub.s32 32, %v637
    %v639 = vshrl.u32 683565275, %v638
    %v640 = vshll.u32 683565275, %v637
    %v641 = vshrl.u32 2475754826, %v638
    %v642 = vor.u32 %v640, %v641
    %v643 = vshll.u32 2475754826, %v637
    %v644 = vshrl.u32 2131351028, %v638
    %v645 = vor.u32 %v643, %v644
    %v646 = vshll.u32 2131351028, %v637
    %v647 = vshrl.u32 2102212464, %v638
    %v648 = vor.u32 %v646, %v647
    %v649 = vshll.u32 2102212464, %v637
    %v650 = vshrl.u32 920167782, %v638
    %v651 = vor.u32 %v649, %v650
    %v652 = vshll.u32 920167782, %v637
    %v653 = vshrl.u32 1326507024, %v638
    %v654 = vor.u32 %v652, %v653
    %vm655 = vcmp.lt.s32.totalorder %v636, 1
    %vm656 = vcmp.lt.s32.totalorder %v636, 2
    %vm657 = vcmp.lt.s32.totalorder %v636, 3
    %vm658 = vcmp.lt.s32.totalorder %v636, 4
    %v659 = vsel %vm655, %v639, %v642
    %v660 = vsel %vm658, %v648, 2102212464
    %v661 = vsel %vm657, %v645, %v660
    %v662 = vsel %vm656, %v659, %v661
    %v663 = vsel %vm655, %v642, %v645
    %v664 = vsel %vm658, %v651, 920167782
    %v665 = vsel %vm657, %v648, %v664
    %v666 = vsel %vm656, %v663, %v665
    %v667 = vsel %vm655, %v645, %v648
    %v668 = vsel %vm658, %v654, 1326507024
    %v669 = vsel %vm657, %v651, %v668
    %v670 = vsel %vm656, %v667, %v669
    %v671 = vshll.u32 %v631, 8
    %v672 = vand.u32 %v671, 65535
    %v673 = vshrl.u32 %v671, 16
    %v674 = vand.u32 %v670, 65535
    %v675 = vshrl.u32 %v670, 16
    %v676 = vmul.u32 %v672, %v674
    %v677 = vmul.u32 %v672, %v675
    %v678 = vmul.u32 %v673, %v674
    %v679 = vmul.u32 %v673, %v675
    %v680 = vshll.u32 %v677, 16
    %v681 = vshrl.u32 %v677, 16
    %v682 = vshll.u32 %v678, 16
    %v683 = vshrl.u32 %v678, 16
    %vm684 = vc.u32 %v676, %v680
    %v685 = vsel %vm684, 1, 0
    %v686 = vadd.s32 %v676, %v680
    %v687 = vadd.s32 %v679, %v685
    %vm688 = vc.u32 %v686, %v682
    %v689 = vsel %vm688, 1, 0
    %v690 = vadd.s32 %v686, %v682
    %v691 = vadd.s32 %v687, %v689
    %v692 = vadd.s32 %v691, %v681
    %v693 = vadd.s32 %v692, %v683
    %v694 = vand.u32 %v671, 65535
    %v695 = vshrl.u32 %v671, 16
    %v696 = vand.u32 %v666, 65535
    %v697 = vshrl.u32 %v666, 16
    %v698 = vmul.u32 %v694, %v696
    %v699 = vmul.u32 %v694, %v697
    %v700 = vmul.u32 %v695, %v696
    %v701 = vmul.u32 %v695, %v697
    %v702 = vshll.u32 %v699, 16
    %v703 = vshrl.u32 %v699, 16
    %v704 = vshll.u32 %v700, 16
    %v705 = vshrl.u32 %v700, 16
    %vm706 = vc.u32 %v698, %v702
    %v707 = vsel %vm706, 1, 0
    %v708 = vadd.s32 %v698, %v702
    %v709 = vadd.s32 %v701, %v707
    %vm710 = vc.u32 %v708, %v704
    %v711 = vsel %vm710, 1, 0
    %v712 = vadd.s32 %v708, %v704
    %v713 = vadd.s32 %v709, %v711
    %v714 = vadd.s32 %v713, %v703
    %v715 = vadd.s32 %v714, %v705
    %v716 = vmul.u32 %v671, %v662
    %v717 = vadd.s32 %v693, %v712
    %vm718 = vc.u32 %v693, %v712
    %v719 = vadd.s32 %v715, 1
    %v720 = vsel %vm718, %v719, %v715
    %v721 = vadd.s32 %v716, %v720
    %v722 = vadd.s32 %v721, 536870912
    %v723 = vshrl.u32 %v722, 30
    %v724 = vshll.u32 %v723, 30
    %v725 = vsub.s32 %v721, %v724
    %vm726 = vcmp.lt.s32.totalorder %v725, 0
    %v727 = vsub.s32 0, %v725
    %v728 = vsel %vm726, %v727, %v725
    %v729 = vclz %v728
    %v730 = vsub.s32 %v729, 2
    %vm731 = vcmp.gt.s32.totalorder 0, %v730
    %v732 = vsel %vm731, 0, %v730
    %v733 = vsub.s32 32, %v732
    %v734 = vshll.u32 %v725, %v732
    %v735 = vshrl.u32 %v717, %v733
    %v736 = vor.u32 %v734, %v735
    %v737 = vsub.s32 4294967266, %v732
    %v738 = vadd.s32 %v737, 127
    %v739 = vshll.u32 %v738, 23
    %v740 = vor.u32 4788187, %v739
    %v741 = vand.u32 2147483647, %v740
    %v743 = vcvt.s32.f32 %v736
    %v744 = vmul.f32 %v743, %v741
    %v745 = vxor.u32 %v744, 2147483648
    %v746 = vsel %vm625, %v745, %v744
    %v747 = vsub.s32 4, %v723
    %v748 = vsel %vm625, %v747, %v723
    %v749 = vsel %vm624, %v467, %v746
    %v750 = vsel %vm624, 0, %v748
    %v751 = vmul.f32 %v749, %v749
    %v752 = vmul.f32 %v751, -0.001358992
    %v753 = vadd.f32 %v752, 0.041655596
    %v754 = vmul.f32 %v751, %v753
    %v755 = vadd.f32 %v754, -0.4999988
    %v756 = vmul.f32 %v751, %v755
    %v757 = vadd.f32 1.0, %v756
    %v758 = vmul.f32 %v749, %v749
    %v759 = vmul.f32 %v758, -0.00019511016
    %v760 = vadd.f32 %v759, 0.008332121
    %v761 = vmul.f32 %v758, %v760
    %v762 = vadd.f32 %v761, -0.16666654
    %v763 = vmul.f32 %v758, %v762
    %v764 = vadd.f32 %v763, 1.0
    %v765 = vmul.f32 %v764, %v749
    %vm766 = vweird.f32 %v467
    %v767 = vand.u32 %v750, 3
    %vm768 = vcmp.lt.s32.totalorder %v767, 2
    %vm769 = vcmp.eq.s32.totalorder %v767, 0
    %v770 = vxor.u32 %v765, 2147483648
    %v771 = vsel %vm769, %v757, %v770
    %vm772 = vcmp.eq.s32.totalorder %v767, 2
    %v773 = vxor.u32 %v757, 2147483648
    %v774 = vsel %vm772, %v773, %v765
    %v775 = vsel %vm768, %v771, %v774
    %v776 = vsel %vm766, nan, %v775
    %v777 = vld [vmem:[%s5] sm:$0xff]
    %v778 = vld [vmem:[%s5 + $0x8] sm:$0xff]
    %v779 = vld [vmem:[%s5 + $0x10] sm:$0xff]
    %v780 = vld [vmem:[%s5 + $0x18] sm:$0xff]
    %v781 = vld [vmem:[%s6] sm:$0x1]
    %v783 = vperm.slane %v781, 0
    %785 = vmatpush.msra.mxu0 0.0
    %786 = vmatpush.msra.mxu0 0.0
    %787 = vmatpush.msra.mxu0 0.0
    %788 = vmatpush.msra.mxu0 0.0
    %789 = vmatpush.msra.mxu0 0.0
    %790 = vmatpush.msra.mxu0 0.0
    %791 = vmatpush.msra.mxu0 0.0
    %792 = vmatpush.msra.mxu0 0.0
    %793 = vmatpush.msra.mxu0 0.0
    %794 = vmatpush.msra.mxu0 0.0
    %795 = vmatpush.msra.mxu0 0.0
    %796 = vmatpush.msra.mxu0 0.0
    %797 = vmatpush.msra.mxu0 %v780
    %798 = vmatpush.msra.mxu0 %v779
    %799 = vmatpush.msra.mxu0 %v778
    %800 = vmatpush.msra.mxu0 %v777
    %801 = vmatmul.f32.gmra.mxu0 %v102
    %v802 = vpop.f32.mrf.mxu0
    %v803 = vadd.f32 %v783, %v802
    %804 = vmatmul.f32.gmra.mxu0 %v105
    %v805 = vpop.f32.mrf.mxu0
    %v806 = vadd.f32 %v783, %v805
    %807 = vdwg.mxu0
    %v808 = vld [vmem:[%s7] sm:$0xff]
    %v809 = vld [vmem:[%s7 + $0x8] sm:$0xff]
    %v810 = vld [vmem:[%s7 + $0x10] sm:$0xff]
    %v811 = vld [vmem:[%s7 + $0x18] sm:$0xff]
    %v812 = vld [vmem:[%s7 + $0x20] sm:$0xff]
    %v813 = vld [vmem:[%s7 + $0x28] sm:$0xff]
    %v814 = vld [vmem:[%s7 + $0x30] sm:$0xff]
    %v815 = vld [vmem:[%s7 + $0x38] sm:$0xff]
    %816 = vxpose.xlu0.b32.start [1/16] %v622, 128
    %817 = vxpose.xlu0.b32.cont [2/16] 0.0, 128
    %818 = vxpose.xlu0.b32.cont [3/16] 0.0, 128
    %819 = vxpose.xlu0.b32.cont [4/16] 0.0, 128
    %820 = vxpose.xlu0.b32.cont [5/16] 0.0, 128
    %821 = vxpose.xlu0.b32.cont [6/16] 0.0, 128
    %822 = vxpose.xlu0.b32.cont [7/16] 0.0, 128
    %823 = vxpose.xlu0.b32.cont [8/16] 0.0, 128
    %824 = vxpose.xlu0.b32.cont [9/16] 0.0, 128
    %825 = vxpose.xlu0.b32.cont [10/16] 0.0, 128
    %826 = vxpose.xlu0.b32.cont [11/16] 0.0, 128
    %827 = vxpose.xlu0.b32.cont [12/16] 0.0, 128
    %828 = vxpose.xlu0.b32.cont [13/16] 0.0, 128
    %829 = vxpose.xlu0.b32.cont [14/16] 0.0, 128
    %830 = vxpose.xlu0.b32.cont [15/16] 0.0, 128
    %831 = vxpose.xlu0.b32.end [16/16] 0.0, 128
    %v832 = vpop.trf.xlu0
    %v833 = vpop.trf.xlu0
    %v834 = vpop.trf.xlu0
    %v835 = vpop.trf.xlu0
    %v836 = vpop.trf.xlu0
    %v837 = vpop.trf.xlu0
    %v838 = vpop.trf.xlu0
    %v839 = vpop.trf.xlu0
    %v840 = vpop.trf.xlu0
    %v841 = vpop.trf.xlu0
    %v842 = vpop.trf.xlu0
    %v843 = vpop.trf.xlu0
    %v844 = vpop.trf.xlu0
    %v845 = vpop.trf.xlu0
    %v846 = vpop.trf.xlu0
    %v847 = vpop.trf.xlu0
    %vm848 = vcmask 64512
    %v850 = vsel %vm848, %v832, 0
    %v853 = vsel %vm848, %v833, 0
    %v856 = vsel %vm848, %v834, 0
    %v859 = vsel %vm848, %v835, 0
    %v862 = vsel %vm848, %v836, 0
    %v865 = vsel %vm848, %v837, 0
    %v868 = vsel %vm848, %v838, 0
    %v871 = vsel %vm848, %v839, 0
    %873 = vmatpush.msra.mxu0 0.0
    %874 = vmatpush.msra.mxu0 0.0
    %875 = vmatpush.msra.mxu0 0.0
    %876 = vmatpush.msra.mxu0 0.0
    %877 = vmatpush.msra.mxu0 0.0
    %878 = vmatpush.msra.mxu0 0.0
    %879 = vmatpush.msra.mxu0 0.0
    %880 = vmatpush.msra.mxu0 0.0
    %881 = vmatpush.msra.mxu0 0.0
    %882 = vmatpush.msra.mxu0 0.0
    %883 = vmatpush.msra.mxu0 0.0
    %884 = vmatpush.msra.mxu0 0.0
    %885 = vmatpush.msra.mxu0 0.0
    %886 = vmatpush.msra.mxu0 0.0
    %887 = vmatpush.msra.mxu0 0.0
    %888 = vmatpush.msra.mxu0 %v803
    %889 = vmatmul.f32.gmra.mxu0 %v850
    %v890 = vpop.f32.mrf.mxu0
    %v891 = vadd.f32 0.0, %v890
    %892 = vmatmul.f32.gmra.mxu0 %v853
    %v893 = vpop.f32.mrf.mxu0
    %v894 = vadd.f32 0.0, %v893
    %895 = vmatmul.f32.gmra.mxu0 %v856
    %v896 = vpop.f32.mrf.mxu0
    %v897 = vadd.f32 0.0, %v896
    %898 = vmatmul.f32.gmra.mxu0 %v859
    %v899 = vpop.f32.mrf.mxu0
    %v900 = vadd.f32 0.0, %v899
    %901 = vmatmul.f32.gmra.mxu0 %v862
    %v902 = vpop.f32.mrf.mxu0
    %v903 = vadd.f32 0.0, %v902
    %904 = vmatmul.f32.gmra.mxu0 %v865
    %v905 = vpop.f32.mrf.mxu0
    %v906 = vadd.f32 0.0, %v905
    %907 = vmatmul.f32.gmra.mxu0 %v868
    %v908 = vpop.f32.mrf.mxu0
    %v909 = vadd.f32 0.0, %v908
    %910 = vmatmul.f32.gmra.mxu0 %v871
    %v911 = vpop.f32.mrf.mxu0
    %v912 = vadd.f32 0.0, %v911
    %913 = vdwg.mxu0
    %v914 = vmul.f32 %v891, %v808
    %v915 = vmul.f32 %v894, %v809
    %v916 = vmul.f32 %v897, %v810
    %v917 = vmul.f32 %v900, %v811
    %v918 = vmul.f32 %v903, %v812
    %v919 = vmul.f32 %v906, %v813
    %v920 = vmul.f32 %v909, %v814
    %v921 = vmul.f32 %v912, %v815
    %vm922 = vcmask 523264
    %v924 = vsel %vm922, %v283, 0
    %926 = vmatpush.msra.mxu0 0.0
    %927 = vmatpush.msra.mxu0 0.0
    %928 = vmatpush.msra.mxu0 0.0
    %929 = vmatpush.msra.mxu0 0.0
    %930 = vmatpush.msra.mxu0 0.0
    %931 = vmatpush.msra.mxu0 0.0
    %932 = vmatpush.msra.mxu0 0.0
    %933 = vmatpush.msra.mxu0 0.0
    %934 = vmatpush.msra.mxu0 %v921
    %935 = vmatpush.msra.mxu0 %v920
    %936 = vmatpush.msra.mxu0 %v919
    %937 = vmatpush.msra.mxu0 %v918
    %938 = vmatpush.msra.mxu0 %v917
    %939 = vmatpush.msra.mxu0 %v916
    %940 = vmatpush.msra.mxu0 %v915
    %941 = vmatpush.msra.mxu0 %v914
    %942 = vmatmul.f32.gmra.mxu0 %v924
    %v943 = vpop.f32.mrf.mxu0
    %v944 = vadd.f32 0.0, %v943
    %945 = vdwg.mxu0
    %946 = vxpose.xlu0.b32.start [1/16] %v776, 128
    %947 = vxpose.xlu0.b32.cont [2/16] 0.0, 128
    %948 = vxpose.xlu0.b32.cont [3/16] 0.0, 128
    %949 = vxpose.xlu0.b32.cont [4/16] 0.0, 128
    %950 = vxpose.xlu0.b32.cont [5/16] 0.0, 128
    %951 = vxpose.xlu0.b32.cont [6/16] 0.0, 128
    %952 = vxpose.xlu0.b32.cont [7/16] 0.0, 128
    %953 = vxpose.xlu0.b32.cont [8/16] 0.0, 128
    %954 = vxpose.xlu0.b32.cont [9/16] 0.0, 128
    %955 = vxpose.xlu0.b32.cont [10/16] 0.0, 128
    %956 = vxpose.xlu0.b32.cont [11/16] 0.0, 128
    %957 = vxpose.xlu0.b32.cont [12/16] 0.0, 128
    %958 = vxpose.xlu0.b32.cont [13/16] 0.0, 128
    %959 = vxpose.xlu0.b32.cont [14/16] 0.0, 128
    %960 = vxpose.xlu0.b32.cont [15/16] 0.0, 128
    %961 = vxpose.xlu0.b32.end [16/16] 0.0, 128
    %v962 = vpop.trf.xlu0
    %v963 = vpop.trf.xlu0
    %v964 = vpop.trf.xlu0
    %v965 = vpop.trf.xlu0
    %v966 = vpop.trf.xlu0
    %v967 = vpop.trf.xlu0
    %v968 = vpop.trf.xlu0
    %v969 = vpop.trf.xlu0
    %v970 = vpop.trf.xlu0
    %v971 = vpop.trf.xlu0
    %v972 = vpop.trf.xlu0
    %v973 = vpop.trf.xlu0
    %v974 = vpop.trf.xlu0
    %v975 = vpop.trf.xlu0
    %v976 = vpop.trf.xlu0
    %v977 = vpop.trf.xlu0
    %v979 = vsel %vm848, %v962, 0
    %v982 = vsel %vm848, %v963, 0
    %v985 = vsel %vm848, %v964, 0
    %v988 = vsel %vm848, %v965, 0
    %v991 = vsel %vm848, %v966, 0
    %v994 = vsel %vm848, %v967, 0
    %v997 = vsel %vm848, %v968, 0
    %v1000 = vsel %vm848, %v969, 0
    %1002 = vmatpush.msra.mxu0 0.0
    %1003 = vmatpush.msra.mxu0 0.0
    %1004 = vmatpush.msra.mxu0 0.0
    %1005 = vmatpush.msra.mxu0 0.0
    %1006 = vmatpush.msra.mxu0 0.0
    %1007 = vmatpush.msra.mxu0 0.0
    %1008 = vmatpush.msra.mxu0 0.0
    %1009 = vmatpush.msra.mxu0 0.0
    %1010 = vmatpush.msra.mxu0 0.0
    %1011 = vmatpush.msra.mxu0 0.0
    %1012 = vmatpush.msra.mxu0 0.0
    %1013 = vmatpush.msra.mxu0 0.0
    %1014 = vmatpush.msra.mxu0 0.0
    %1015 = vmatpush.msra.mxu0 0.0
    %1016 = vmatpush.msra.mxu0 0.0
    %1017 = vmatpush.msra.mxu0 %v806
    %1018 = vmatmul.f32.gmra.mxu0 %v979
    %v1019 = vpop.f32.mrf.mxu0
    %v1020 = vadd.f32 0.0, %v1019
    %1021 = vmatmul.f32.gmra.mxu0 %v982
    %v1022 = vpop.f32.mrf.mxu0
    %v1023 = vadd.f32 0.0, %v1022
    %1024 = vmatmul.f32.gmra.mxu0 %v985
    %v1025 = vpop.f32.mrf.mxu0
    %v1026 = vadd.f32 0.0, %v1025
    %1027 = vmatmul.f32.gmra.mxu0 %v988
    %v1028 = vpop.f32.mrf.mxu0
    %v1029 = vadd.f32 0.0, %v1028
    %1030 = vmatmul.f32.gmra.mxu0 %v991
    %v1031 = vpop.f32.mrf.mxu0
    %v1032 = vadd.f32 0.0, %v1031
    %1033 = vmatmul.f32.gmra.mxu0 %v994
    %v1034 = vpop.f32.mrf.mxu0
    %v1035 = vadd.f32 0.0, %v1034
    %1036 = vmatmul.f32.gmra.mxu0 %v997
    %v1037 = vpop.f32.mrf.mxu0
    %v1038 = vadd.f32 0.0, %v1037
    %1039 = vmatmul.f32.gmra.mxu0 %v1000
    %v1040 = vpop.f32.mrf.mxu0
    %v1041 = vadd.f32 0.0, %v1040
    %1042 = vdwg.mxu0
    %v1043 = vmul.f32 %v1020, %v808
    %v1044 = vmul.f32 %v1023, %v809
    %v1045 = vmul.f32 %v1026, %v810
    %v1046 = vmul.f32 %v1029, %v811
    %v1047 = vmul.f32 %v1032, %v812
    %v1048 = vmul.f32 %v1035, %v813
    %v1049 = vmul.f32 %v1038, %v814
    %v1050 = vmul.f32 %v1041, %v815
    %v1052 = vsel %vm922, %v437, 0
    %1054 = vmatpush.msra.mxu0 0.0
    %1055 = vmatpush.msra.mxu0 0.0
    %1056 = vmatpush.msra.mxu0 0.0
    %1057 = vmatpush.msra.mxu0 0.0
    %1058 = vmatpush.msra.mxu0 0.0
    %1059 = vmatpush.msra.mxu0 0.0
    %1060 = vmatpush.msra.mxu0 0.0
    %1061 = vmatpush.msra.mxu0 0.0
    %1062 = vmatpush.msra.mxu0 %v1050
    %1063 = vmatpush.msra.mxu0 %v1049
    %1064 = vmatpush.msra.mxu0 %v1048
    %1065 = vmatpush.msra.mxu0 %v1047
    %1066 = vmatpush.msra.mxu0 %v1046
    %1067 = vmatpush.msra.mxu0 %v1045
    %1068 = vmatpush.msra.mxu0 %v1044
    %1069 = vmatpush.msra.mxu0 %v1043
    %1070 = vmatmul.f32.gmra.mxu0 %v1052
    %v1071 = vpop.f32.mrf.mxu0
    %v1072 = vadd.f32 0.0, %v1071
    %1073 = vdwg.mxu0
    %v1074 = vld [vmem:[%s8] sm:$0xff]
    %v1075 = vld [vmem:[%s8 + $0x8] sm:$0xff]
    %v1076 = vld [vmem:[%s8 + $0x10] sm:$0xff]
    %v1077 = vld [vmem:[%s8 + $0x18] sm:$0xff]
    %v1078 = vld [vmem:[%s9] sm:$0x1]
    %v1080 = vperm.slane %v1078, 0
    %v1083 = vsel %vm100, %v944, 0
    %v1086 = vsel %vm100, %v1072, 0
    %1088 = vmatpush.msra.mxu0 0.0
    %1089 = vmatpush.msra.mxu0 0.0
    %1090 = vmatpush.msra.mxu0 0.0
    %1091 = vmatpush.msra.mxu0 0.0
    %1092 = vmatpush.msra.mxu0 0.0
    %1093 = vmatpush.msra.mxu0 0.0
    %1094 = vmatpush.msra.mxu0 0.0
    %1095 = vmatpush.msra.mxu0 0.0
    %1096 = vmatpush.msra.mxu0 0.0
    %1097 = vmatpush.msra.mxu0 0.0
    %1098 = vmatpush.msra.mxu0 0.0
    %1099 = vmatpush.msra.mxu0 0.0
    %1100 = vmatpush.msra.mxu0 %v1077
    %1101 = vmatpush.msra.mxu0 %v1076
    %1102 = vmatpush.msra.mxu0 %v1075
    %1103 = vmatpush.msra.mxu0 %v1074
    %1104 = vmatmul.f32.gmra.mxu0 %v1083
    %v1105 = vpop.f32.mrf.mxu0
    %v1106 = vadd.f32 %v1080, %v1105
    %1107 = vmatmul.f32.gmra.mxu0 %v1086
    %v1108 = vpop.f32.mrf.mxu0
    %v1109 = vadd.f32 %v1080, %v1108
    %1110 = vdwg.mxu0
    %v1111 = vadd.f32 %v90, %v1106
    %v1112 = vadd.f32 %v91, %v1109
    %v1113 = vld [vmem:[%s14] sm:$0x1]
    %v1114 = vld [vmem:[%s15] sm:$0x1]
    %v1115 = vsel %vm100, %v1111, 0.0
    %1116 = vadd.xlane.f32.xlu0 %v1115
    %v1117 = vpop.xlane.xlu0 %1116
    %v1118 = vsel %vm100, %v1112, 0.0
    %1119 = vadd.xlane.f32.xlu0 %v1118
    %v1120 = vpop.xlane.xlu0 %1119
    %v1121 = vrcp.pop 32.0
    %v1122 = vmul.f32 32.0, %v1121
    %v1123 = vsub.f32 1.0, %v1122
    %v1124 = vmul.f32 %v1121, %v1123
    %v1125 = vadd.f32 %v1121, %v1124
    %vm1126 = vweird.f32 %v1121
    %v1127 = vsel %vm1126, %v1121, %v1125
    %v1128 = vmul.f32 %v1117, %v1127
    %v1129 = vmul.f32 %v1120, %v1127
    %v1130 = vsub.f32 %v1111, %v1128
    %v1131 = vsub.f32 %v1112, %v1129
    %v1132 = vmul.f32 %v1130, %v1130
    %v1133 = vmul.f32 %v1131, %v1131
    %v1134 = vsel %vm100, %v1132, 0.0
    %1135 = vadd.xlane.f32.xlu0 %v1134
    %v1136 = vpop.xlane.xlu0 %1135
    %v1137 = vsel %vm100, %v1133, 0.0
    %1138 = vadd.xlane.f32.xlu0 %v1137
    %v1139 = vpop.xlane.xlu0 %1138
    %v1140 = vmul.f32 %v1136, %v1127
    %v1141 = vmul.f32 %v1139, %v1127
    %v1142 = vadd.f32 %v1140, 1e-05
    %v1143 = vadd.f32 %v1141, 1e-05
    %v1144 = vrsqrt.pop %v1142
    %v1145 = vmul.f32 %v1144, %v1142
    %v1146 = vmul.f32 %v1145, %v1144
    %v1147 = vmul.f32 0.5, %v1146
    %v1148 = vsub.f32 1.5, %v1147
    %v1149 = vmul.f32 %v1144, %v1148
    %vm1150 = vweird.f32 %v1142
    %vm1151 = vweird.f32 %v1144
    %vm1152 = vmor %vm1150, %vm1151
    %v1153 = vsel %vm1152, %v1144, %v1149
    %v1154 = vrsqrt.pop %v1143
    %v1155 = vmul.f32 %v1154, %v1143
    %v1156 = vmul.f32 %v1155, %v1154
    %v1157 = vmul.f32 0.5, %v1156
    %v1158 = vsub.f32 1.5, %v1157
    %v1159 = vmul.f32 %v1154, %v1158
    %vm1160 = vweird.f32 %v1143
    %vm1161 = vweird.f32 %v1154
    %vm1162 = vmor %vm1160, %vm1161
    %v1163 = vsel %vm1162, %v1154, %v1159
    %v1164 = vmul.f32 %v1130, %v1153
    %v1165 = vmul.f32 %v1131, %v1163
    %v1167 = vperm.slane %v1113, 0
    %v1169 = vmul.f32 %v1164, %v1167
    %v1170 = vmul.f32 %v1165, %v1167
    %v1172 = vperm.slane %v1114, 0
    %v1174 = vadd.f32 %v1169, %v1172
    %v1175 = vadd.f32 %v1170, %v1172
    %v1176 = vld [vmem:[%s10] sm:$0xff]
    %v1177 = vld [vmem:[%s10 + $0x8] sm:$0xff]
    %v1178 = vld [vmem:[%s10 + $0x10] sm:$0xff]
    %v1179 = vld [vmem:[%s10 + $0x18] sm:$0xff]
    %v1180 = vld [vmem:[%s11] sm:$0x1]
    %v1182 = vperm.slane %v1180, 0
    %v1185 = vsel %vm100, %v1174, 0
    %v1188 = vsel %vm100, %v1175, 0
    %1190 = vmatpush.msra.mxu0 0.0
    %1191 = vmatpush.msra.mxu0 0.0
    %1192 = vmatpush.msra.mxu0 0.0
    %1193 = vmatpush.msra.mxu0 0.0
    %1194 = vmatpush.msra.mxu0 0.0
    %1195 = vmatpush.msra.mxu0 0.0
    %1196 = vmatpush.msra.mxu0 0.0
    %1197 = vmatpush.msra.mxu0 0.0
    %1198 = vmatpush.msra.mxu0 0.0
    %1199 = vmatpush.msra.mxu0 0.0
    %1200 = vmatpush.msra.mxu0 0.0
    %1201 = vmatpush.msra.mxu0 0.0
    %1202 = vmatpush.msra.mxu0 %v1179
    %1203 = vmatpush.msra.mxu0 %v1178
    %1204 = vmatpush.msra.mxu0 %v1177
    %1205 = vmatpush.msra.mxu0 %v1176
    %1206 = vmatmul.f32.gmra.mxu0 %v1185
    %v1207 = vpop.f32.mrf.mxu0
    %v1208 = vadd.f32 %v1182, %v1207
    %1209 = vmatmul.f32.gmra.mxu0 %v1188
    %v1210 = vpop.f32.mrf.mxu0
    %v1211 = vadd.f32 %v1182, %v1210
    %1212 = vdwg.mxu0
    %v1213 = vmul.f32 %v1208, 0.5
    %v1214 = vmul.f32 %v1211, 0.5
    %v1215 = vmul.f32 %v1208, 0.70710677
    %v1216 = vmul.f32 %v1211, 0.70710677
    %v1217 = vmul.f32 %v1215, %v1215
    %v1218 = vmin.f32 16.0, %v1217
    %v1219 = vmul.f32 %v1218, 2.1237322e-06
    %v1220 = vadd.f32 %v1219, 0.00028619796
    %v1221 = vmul.f32 %v1218, %v1220
    %v1222 = vadd.f32 %v1221, 0.0036580483
    %v1223 = vmul.f32 %v1218, %v1222
    %v1224 = vadd.f32 %v1223, 0.05243302
    %v1225 = vmul.f32 %v1218, %v1224
    %v1226 = vadd.f32 %v1225, 0.18741608
    %v1227 = vmul.f32 %v1218, %v1226
    %v1228 = vadd.f32 %v1227, 1.1283791
    %v1229 = vmul.f32 %v1215, %v1228
    %v1230 = vmul.f32 %v1218, 3.8918573e-05
    %v1231 = vadd.f32 %v1230, 0.001143296
    %v1232 = vmul.f32 %v1218, %v1231
    %v1233 = vadd.f32 %v1232, 0.014752088
    %v1234 = vmul.f32 %v1218, %v1233
    %v1235 = vadd.f32 %v1234, 0.112945676
    %v1236 = vmul.f32 %v1218, %v1235
    %v1237 = vadd.f32 %v1236, 0.4994258
    %v1238 = vmul.f32 %v1218, %v1237
    %v1239 = vadd.f32 %v1238, 1.0
    %v1240 = vrcp.pop %v1239
    %v1241 = vmul.f32 %v1239, %v1240
    %v1242 = vsub.f32 1.0, %v1241
    %v1243 = vmul.f32 %v1240, %v1242
    %v1244 = vadd.f32 %v1240, %v1243
    %vm1245 = vweird.f32 %v1239
    %vm1246 = vweird.f32 %v1240
    %vm1247 = vmor %vm1245, %vm1246
    %v1248 = vsel %vm1247, %v1240, %v1244
    %v1249 = vand.u32 2147483647, %v1239
    %vm1250 = vcmp.eq.f32.partialorder %v1249, 8.507059e+37
    %v1251 = vand.u32 %v1239, 2147483648
    %v1252 = vor.u32 1.1754944e-38, %v1251
    %v1253 = vsel %vm1250, %v1252, %v1248
    %v1254 = vmul.f32 %v1229, %v1253
    %v1255 = vmin.f32 %v1254, 1.0
    %v1256 = vmax.f32 %v1255, -1.0
    %v1257 = vmul.f32 %v1216, %v1216
    %v1258 = vmin.f32 16.0, %v1257
    %v1259 = vmul.f32 %v1258, 2.1237322e-06
    %v1260 = vadd.f32 %v1259, 0.00028619796
    %v1261 = vmul.f32 %v1258, %v1260
    %v1262 = vadd.f32 %v1261, 0.0036580483
    %v1263 = vmul.f32 %v1258, %v1262
    %v1264 = vadd.f32 %v1263, 0.05243302
    %v1265 = vmul.f32 %v1258, %v1264
    %v1266 = vadd.f32 %v1265, 0.18741608
    %v1267 = vmul.f32 %v1258, %v1266
    %v1268 = vadd.f32 %v1267, 1.1283791
    %v1269 = vmul.f32 %v1216, %v1268
    %v1270 = vmul.f32 %v1258, 3.8918573e-05
    %v1271 = vadd.f32 %v1270, 0.001143296
    %v1272 = vmul.f32 %v1258, %v1271
    %v1273 = vadd.f32 %v1272, 0.014752088
    %v1274 = vmul.f32 %v1258, %v1273
    %v1275 = vadd.f32 %v1274, 0.112945676
    %v1276 = vmul.f32 %v1258, %v1275
    %v1277 = vadd.f32 %v1276, 0.4994258
    %v1278 = vmul.f32 %v1258, %v1277
    %v1279 = vadd.f32 %v1278, 1.0
    %v1280 = vrcp.pop %v1279
    %v1281 = vmul.f32 %v1279, %v1280
    %v1282 = vsub.f32 1.0, %v1281
    %v1283 = vmul.f32 %v1280, %v1282
    %v1284 = vadd.f32 %v1280, %v1283
    %vm1285 = vweird.f32 %v1279
    %vm1286 = vweird.f32 %v1280
    %vm1287 = vmor %vm1285, %vm1286
    %v1288 = vsel %vm1287, %v1280, %v1284
    %v1289 = vand.u32 2147483647, %v1279
    %vm1290 = vcmp.eq.f32.partialorder %v1289, 8.507059e+37
    %v1291 = vand.u32 %v1279, 2147483648
    %v1292 = vor.u32 1.1754944e-38, %v1291
    %v1293 = vsel %vm1290, %v1292, %v1288
    %v1294 = vmul.f32 %v1269, %v1293
    %v1295 = vmin.f32 %v1294, 1.0
    %v1296 = vmax.f32 %v1295, -1.0
    %v1297 = vadd.f32 %v1256, 1.0
    %v1298 = vadd.f32 %v1296, 1.0
    %v1299 = vmul.f32 %v1213, %v1297
    %v1300 = vmul.f32 %v1214, %v1298
    %v1301 = vld [vmem:[%s12] sm:$0xff]
    %v1302 = vld [vmem:[%s12 + $0x8] sm:$0xff]
    %v1303 = vld [vmem:[%s12 + $0x10] sm:$0xff]
    %v1304 = vld [vmem:[%s12 + $0x18] sm:$0xff]
    %v1305 = vld [vmem:[%s12 + $0x20] sm:$0xff]
    %v1306 = vld [vmem:[%s12 + $0x28] sm:$0xff]
    %v1307 = vld [vmem:[%s12 + $0x30] sm:$0xff]
    %v1308 = vld [vmem:[%s12 + $0x38] sm:$0xff]
    %v1309 = vld [vmem:[%s13] sm:$0x1]
    %v1311 = vperm.slane %v1309, 0
    %v1314 = vsel %vm922, %v1299, 0
    %v1317 = vsel %vm922, %v1300, 0
    %1319 = vmatpush.msra.mxu0 0.0
    %1320 = vmatpush.msra.mxu0 0.0
    %1321 = vmatpush.msra.mxu0 0.0
    %1322 = vmatpush.msra.mxu0 0.0
    %1323 = vmatpush.msra.mxu0 0.0
    %1324 = vmatpush.msra.mxu0 0.0
    %1325 = vmatpush.msra.mxu0 0.0
    %1326 = vmatpush.msra.mxu0 0.0
    %1327 = vmatpush.msra.mxu0 %v1308
    %1328 = vmatpush.msra.mxu0 %v1307
    %1329 = vmatpush.msra.mxu0 %v1306
    %1330 = vmatpush.msra.mxu0 %v1305
    %1331 = vmatpush.msra.mxu0 %v1304
    %1332 = vmatpush.msra.mxu0 %v1303
    %1333 = vmatpush.msra.mxu0 %v1302
    %1334 = vmatpush.msra.mxu0 %v1301
    %1335 = vmatmul.f32.gmra.mxu0 %v1314
    %v1336 = vpop.f32.mrf.mxu0
    %v1337 = vadd.f32 %v1311, %v1336
    %1338 = vmatmul.f32.gmra.mxu0 %v1317
    %v1339 = vpop.f32.mrf.mxu0
    %v1340 = vadd.f32 %v1311, %v1339
    %1341 = vdwg.mxu0
    %v1342 = vadd.f32 %v1174, %v1337
    %v1343 = vadd.f32 %v1175, %v1340
    %v1344 = vld [vmem:[%s16] sm:$0x1]
    %v1345 = vld [vmem:[%s17] sm:$0x1]
    %v1346 = vsel %vm100, %v1342, 0.0
    %1347 = vadd.xlane.f32.xlu0 %v1346
    %v1348 = vpop.xlane.xlu0 %1347
    %v1349 = vsel %vm100, %v1343, 0.0
    %1350 = vadd.xlane.f32.xlu0 %v1349
    %v1351 = vpop.xlane.xlu0 %1350
    %v1352 = vmul.f32 %v1348, %v1127
    %v1353 = vmul.f32 %v1351, %v1127
    %v1354 = vsub.f32 %v1342, %v1352
    %v1355 = vsub.f32 %v1343, %v1353
    %v1356 = vmul.f32 %v1354, %v1354
    %v1357 = vmul.f32 %v1355, %v1355
    %v1358 = vsel %vm100, %v1356, 0.0
    %1359 = vadd.xlane.f32.xlu0 %v1358
    %v1360 = vpop.xlane.xlu0 %1359
    %v1361 = vsel %vm100, %v1357, 0.0
    %1362 = vadd.xlane.f32.xlu0 %v1361
    %v1363 = vpop.xlane.xlu0 %1362
    %v1364 = vmul.f32 %v1360, %v1127
    %v1365 = vmul.f32 %v1363, %v1127
    %v1366 = vadd.f32 %v1364, 1e-05
    %v1367 = vadd.f32 %v1365, 1e-05
    %v1368 = vrsqrt.pop %v1366
    %v1369 = vmul.f32 %v1368, %v1366
    %v1370 = vmul.f32 %v1369, %v1368
    %v1371 = vmul.f32 0.5, %v1370
    %v1372 = vsub.f32 1.5, %v1371
    %v1373 = vmul.f32 %v1368, %v1372
    %vm1374 = vweird.f32 %v1366
    %vm1375 = vweird.f32 %v1368
    %vm1376 = vmor %vm1374, %vm1375
    %v1377 = vsel %vm1376, %v1368, %v1373
    %v1378 = vrsqrt.pop %v1367
    %v1379 = vmul.f32 %v1378, %v1367
    %v1380 = vmul.f32 %v1379, %v1378
    %v1381 = vmul.f32 0.5, %v1380
    %v1382 = vsub.f32 1.5, %v1381
    %v1383 = vmul.f32 %v1378, %v1382
    %vm1384 = vweird.f32 %v1367
    %vm1385 = vweird.f32 %v1378
    %vm1386 = vmor %vm1384, %vm1385
    %v1387 = vsel %vm1386, %v1378, %v1383
    %v1388 = vmul.f32 %v1354, %v1377
    %v1389 = vmul.f32 %v1355, %v1387
    %v1391 = vperm.slane %v1344, 0
    %v1393 = vmul.f32 %v1388, %v1391
    %v1394 = vmul.f32 %v1389, %v1391
    %v1396 = vperm.slane %v1345, 0
    %v1398 = vadd.f32 %v1393, %v1396
    %v1399 = vadd.f32 %v1394, %v1396
    %1400 = vst.msk [vmem:[#allocation7] sm:$0xff] %vm100, %v1398
    %1401 = vst.msk [vmem:[#allocation7 + $0x8] sm:$0xff] %vm100, %v1399
    // Predicated region
    $region82: #{tpu_custom_call.1} parent=1 // pred_check
      _
    $region83: #{tpu_custom_call.1} parent=1 // pred_check_branch
      %1403 = sbr.rel (0) target = $region85
    $region84: #{tpu_custom_call.1} parent=1 // pred_region
      %1405 = vsyncadd [#allocation4], 0
      %s1406 = sshll.u32 [#allocation7], 4
      %s1407 = int_to_ptr.vmem [resolvable:$true] %s1406
      %s1408 = sshll.u32 %s18, 4
      %s1409 = int_to_ptr.hbm [resolvable:$true] %s1408
      %1414 = dma.vmem_to_hbm [thread:$0]  %s1407, 256, %s1409, [#allocation4], 128, 128, 8
    $region85: #{tpu_custom_call.1} parent=1 // pred_fallthru
      _
    // Predicated region
    $region86: #{tpu_custom_call.1} parent=1 // pred_check
      _
    $region87: #{tpu_custom_call.1} parent=1 // pred_check_branch
      %1416 = sbr.rel (0) target = $region89
    $region88: #{tpu_custom_call.1} parent=1 // pred_region
      %1418 = dma.done [#allocation4], 256
    $region89: #{tpu_custom_call.1} parent=1 // pred_fallthru
      _
    %1419 = vsyncpa [#allocation3], 1
    %1420 = vsyncpa [#allocation6], 1
    %1421 = vsyncpa [#allocation4], 1

</llo_original>
